<compile_context>
chip_gen: v5e
topology: v5e:2x2
jax: 0.10.0
libtpu: 0.0.40
codegen_flags: <defaults>
</compile_context>

<pallas_src>
import math

import jax
import jax.numpy as jnp
from jax import lax
from jax.experimental import pallas as pl
from jax.experimental.pallas import tpu as pltpu

# ----------------------------- problem sizes ------------------------------
D = 32           # embedding_dim
H = 4            # num_heads
DH = D // H      # head dim
M = 64           # mlp_dim
B = 2            # number of point-cloud batches
NQ = 16          # total queries (8 per batch)
NS = 64          # total source points (32 per batch)

NEG_INF = -1e9
LN_EPS = 1e-5
SCALE = 1.0 / math.sqrt(DH)

# --------------------------- packed slab layouts ---------------------------
# token slab (T_ROWS, D): src | src_pe | qry | qry_pe stacked on rows (all offsets %8==0)
T_SRC, T_SPE, T_QRY, T_QPE = 0, NS, 2 * NS, 2 * NS + NQ
T_ROWS = 2 * NS + 2 * NQ                      # 160

# bias slab (2*NQ, NS): additive {0,-1e9} masks; rows 0:NQ cross, rows NQ:2NQ self (lane-padded)
BIAS_ROWS, BIAS_COLS = 2 * NQ, NS

# weight slab (W_ROWS, W_COLS): each weight at a static row offset, lane-prefix used
W_COLS = max(2 * D, M)                        # 64
W_CWQ, W_CWK, W_CWV, W_CWO = 0, D, 2 * D, 3 * D       # cross attn (wq pre-scaled)
W_SQK, W_SWV, W_SWO = 4 * D, 5 * D, 6 * D             # self attn ([wq*s | wk] fused)
W_FW1, W_FW2 = 7 * D, 8 * D                           # ffn
W_ROWS = 8 * D + M                            # 320

# vector slab (V_ROWS, W_COLS): one bias / LN vector per row (unused lanes zero)
V_CBQ, V_CBK, V_CBV, V_CBO, V_CG, V_CB = 0, 1, 2, 3, 4, 5
V_SBQK, V_SBV, V_SBO, V_SG, V_SB = 6, 7, 8, 9, 10
V_FB1, V_FB2, V_FG, V_FB = 11, 12, 13, 14
V_ROWS = 16


# ------------------------------- fused kernel -------------------------------
def mask3d_block_kernel(tok_ref, bias_ref, w_ref, vec_ref, out_ref):
    # ---------- unpack packed operands (static slices, VMEM-local) ----------
    src = tok_ref[T_SRC:T_SRC + NS, :]
    src_pe = tok_ref[T_SPE:T_SPE + NS, :]
    qry = tok_ref[T_QRY:T_QRY + NQ, :]
    q_pe = tok_ref[T_QPE:T_QPE + NQ, :]

    cross_bias = bias_ref[0:NQ, :]                 # (NQ, NS) additive {0, -1e9}
    self_bias = bias_ref[NQ:2 * NQ, 0:NQ]          # (NQ, NQ)

    def wslab(row, rows, cols=D):
        return w_ref[row:row + rows, 0:cols]

    def vrow(row, cols=D):
        return vec_ref[row:row + 1, 0:cols]        # (1, cols), broadcasts over rows

    inv_d = 1.0 / D

    def layernorm(x, g, b):
        # one-pass LN: both reductions are independent (issue concurrently on XLU)
        s1 = jnp.sum(x, axis=-1, keepdims=True)
        s2 = jnp.sum(x * x, axis=-1, keepdims=True)
        mean = s1 * inv_d
        var = s2 * inv_d - mean * mean
        return (x - mean) * lax.rsqrt(var + LN_EPS) * g + b

    def attention(Q, K, V, bias):
        # per-head scores contract the shared last dim directly (no K transpose);
        # 1/sqrt(DH) is already folded into the Q projection.
        heads = []
        for h in range(H):                          # static unroll over heads
            sl = slice(h * DH, (h + 1) * DH)
            s = lax.dot_general(Q[:, sl], K[:, sl], (((1,), (1,)), ((), ())),
                                preferred_element_type=jnp.float32)
            s = s + bias
            s = s - jnp.max(s, axis=-1, keepdims=True)   # kept for PyTorch parity
            p = jnp.exp(s)
            p = p * pl.reciprocal(jnp.sum(p, axis=-1, keepdims=True), approx=True)
            heads.append(jnp.dot(p, V[:, sl], preferred_element_type=jnp.float32))
        # lane concat of H x (NQ, DH) -> (NQ, D): single vreg span at D=32, so the
        # output projection below runs as ONE full-K matmul.
        return jnp.concatenate(heads, axis=-1)

    # ---- stage 1: masked query -> source cross attention, residual + LN ----
    q_in = qry + q_pe
    k_in = src + src_pe
    Qc = jnp.dot(q_in, wslab(W_CWQ, D), preferred_element_type=jnp.float32) + vrow(V_CBQ)
    Kc = jnp.dot(k_in, wslab(W_CWK, D), preferred_element_type=jnp.float32) + vrow(V_CBK)
    Vc = jnp.dot(src, wslab(W_CWV, D), preferred_element_type=jnp.float32) + vrow(V_CBV)
    att = attention(Qc, Kc, Vc, cross_bias)
    proj = jnp.dot(att, wslab(W_CWO, D), preferred_element_type=jnp.float32) + vrow(V_CBO)
    x = layernorm(qry + proj, vrow(V_CG), vrow(V_CB))          # layer_drop = 0

    # ---- stage 2: per-batch (block-diagonal) self attention, residual + LN ----
    x_pe = x + q_pe
    qk = jnp.dot(x_pe, wslab(W_SQK, D, 2 * D),                  # fused Q|K projection
                 preferred_element_type=jnp.float32) + vrow(V_SBQK, 2 * D)
    Qs = qk[:, 0:D]
    Ks = qk[:, D:2 * D]
    Vs = jnp.dot(x, wslab(W_SWV, D), preferred_element_type=jnp.float32) + vrow(V_SBV)
    att2 = attention(Qs, Ks, Vs, self_bias)
    proj2 = jnp.dot(att2, wslab(W_SWO, D), preferred_element_type=jnp.float32) + vrow(V_SBO)
    y = layernorm(x + proj2, vrow(V_SG), vrow(V_SB))

    # ---- stage 3: FFN (ReLU), residual + LN (normalize_before=False) ----
    hid = jnp.maximum(
        jnp.dot(y, wslab(W_FW1, D, M), preferred_element_type=jnp.float32) + vrow(V_FB1, M),
        0.0)
    z = jnp.dot(hid, wslab(W_FW2, M, D), preferred_element_type=jnp.float32) + vrow(V_FB2)
    out_ref[...] = layernorm(y + z, vrow(V_FG), vrow(V_FB)).astype(out_ref.dtype)


# ------------------------------ wrapper / packing ----------------------------
def _pad_cols(a, cols):
    return jnp.pad(a, ((0, 0), (0, cols - a.shape[1])))


def _pack_params(params):
    cp, sp, fp = params["cross"], params["self"], params["ffn"]
    # 1/sqrt(DH) folded into the Q projection weights AND biases.
    w_slab = jnp.concatenate([
        _pad_cols(cp["wq"] * SCALE, W_COLS),
        _pad_cols(cp["wk"], W_COLS),
        _pad_cols(cp["wv"], W_COLS),
        _pad_cols(cp["wo"], W_COLS),
        _pad_cols(jnp.concatenate([sp["wq"] * SCALE, sp["wk"]], axis=1), W_COLS),
        _pad_cols(sp["wv"], W_COLS),
        _pad_cols(sp["wo"], W_COLS),
        _pad_cols(fp["w1"], W_COLS),
        _pad_cols(fp["w2"], W_COLS),
    ], axis=0).astype(jnp.float32)

    def row(v):
        return _pad_cols(v.reshape(1, -1), W_COLS)

    vec_slab = jnp.concatenate([
        row(cp["bq"] * SCALE), row(cp["bk"]), row(cp["bv"]), row(cp["bo"]),
        row(cp["ln_g"]), row(cp["ln_b"]),
        row(jnp.concatenate([sp["bq"] * SCALE, sp["bk"]], axis=-1)),
        row(sp["bv"]), row(sp["bo"]), row(sp["ln_g"]), row(sp["ln_b"]),
        row(fp["b1"]), row(fp["b2"]), row(fp["ln_g"]), row(fp["ln_b"]),
        jnp.zeros((1, W_COLS), jnp.float32),
    ], axis=0).astype(jnp.float32)
    return w_slab, vec_slab


def mask3d_decoder_block(source, query, source_batch, query_batch,
                         source_pe, query_pe, attn_mask, params):
    # ----- additive attention biases, built once outside the kernel -----
    same_batch = query_batch[:, None] == source_batch[None, :]            # (NQ, NS)
    # Mask3D guard: if a query row's attn_mask blocks every same-batch key, drop its
    # attn_mask (keep the batch restriction) instead of degenerating / leaking.
    fully_blocked = jnp.all(jnp.where(same_batch, attn_mask, True),
                            axis=-1, keepdims=True)
    eff_mask = jnp.where(fully_blocked, False, attn_mask)
    allowed = jnp.logical_and(same_batch, jnp.logical_not(eff_mask))
    cross_bias = jnp.where(allowed, 0.0, NEG_INF).astype(jnp.float32)
    self_bias = jnp.where(query_batch[:, None] == query_batch[None, :],
                          0.0, NEG_INF).astype(jnp.float32)
    bias_slab = jnp.concatenate([cross_bias, _pad_cols(self_bias, BIAS_COLS)], axis=0)

    tok_slab = jnp.concatenate(
        [source, source_pe, query, query_pe], axis=0).astype(jnp.float32)   # (160, D)

    w_slab, vec_slab = _pack_params(params)

    vmem = pltpu.MemorySpace.VMEM
    inputs = [tok_slab, bias_slab, w_slab, vec_slab]      # 4 operands (was ~32)
    q_final = pl.pallas_call(
        mask3d_block_kernel,
        out_shape=jax.ShapeDtypeStruct((NQ, D), jnp.float32),
        in_specs=[pl.BlockSpec(memory_space=vmem) for _ in inputs],
        out_specs=pl.BlockSpec(memory_space=vmem),
    )(*inputs)
    # TODO(synk): when this block is stacked L times / across feature levels inside the
    # full Mask3D decoder, grid over layers (weights streamed via index_map, query
    # carried as accumulator) to amortize launch + DMA cost; one layer here matches the
    # module's forward exactly.
    return source, q_final


# ------------------------------ pure-JAX reference ---------------------------
def _reference_block(source, query, source_batch, query_batch,
                     source_pe, query_pe, attn_mask, params):
    def mha(q_in, k_in, v_in, bias, p):
        Q = q_in @ p["wq"] + p["bq"]
        K = k_in @ p["wk"] + p["bk"]
        V = v_in @ p["wv"] + p["bv"]
        outs = []
        for h in range(H):
            sl = slice(h * DH, (h + 1) * DH)
            s = (Q[:, sl] @ K[:, sl].T) * SCALE + bias
            outs.append(jax.nn.softmax(s, axis=-1) @ V[:, sl])
        return jnp.concatenate(outs, axis=-1) @ p["wo"] + p["bo"]

    def ln(x, g, b):
        mu = jnp.mean(x, -1, keepdims=True)
        var = jnp.mean((x - mu) ** 2, -1, keepdims=True)
        return (x - mu) / jnp.sqrt(var + LN_EPS) * g + b

    same = query_batch[:, None] == source_batch[None, :]
    fully = jnp.all(jnp.where(same, attn_mask, True), axis=-1, keepdims=True)
    eff = jnp.where(fully, False, attn_mask)
    cbias = jnp.where(jnp.logical_and(same, jnp.logical_not(eff)), 0.0, NEG_INF)
    sbias = jnp.where(query_batch[:, None] == query_batch[None, :], 0.0, NEG_INF)

    cp, sp, fp = params["cross"], params["self"], params["ffn"]
    x = ln(query + mha(query + query_pe, source + source_pe, source, cbias, cp),
           cp["ln_g"], cp["ln_b"])
    y = ln(x + mha(x + query_pe, x + query_pe, x, sbias, sp), sp["ln_g"], sp["ln_b"])
    h = jax.nn.relu(y @ fp["w1"] + fp["b1"])
    return ln(y + (h @ fp["w2"] + fp["b2"]), fp["ln_g"], fp["ln_b"])


# ------------------------------ param init ---------------------------------
def _attn_params(key):
    ks = jax.random.split(key, 4)
    std = 0.02
    return {
        "wq": jax.random.normal(ks[0], (D, D), jnp.float32) * std,
        "bq": jnp.zeros((1, D), jnp.float32),
        "wk": jax.random.normal(ks[1], (D, D), jnp.float32) * std,
        "bk": jnp.zeros((1, D), jnp.float32),
        "wv": jax.random.normal(ks[2], (D, D), jnp.float32) * std,
        "bv": jnp.zeros((1, D), jnp.float32),
        "wo": jax.random.normal(ks[3], (D, D), jnp.float32) * std,
        "bo": jnp.zeros((1, D), jnp.float32),
        "ln_g": jnp.ones((1, D), jnp.float32),
        "ln_b": jnp.zeros((1, D), jnp.float32),
    }


def _ffn_params(key):
    k1, k2 = jax.random.split(key)
    std = 0.02
    return {
        "w1": jax.random.normal(k1, (D, M), jnp.float32) * std,
        "b1": jnp.zeros((1, M), jnp.float32),
        "w2": jax.random.normal(k2, (M, D), jnp.float32) * std,
        "b2": jnp.zeros((1, D), jnp.float32),
        "ln_g": jnp.ones((1, D), jnp.float32),
        "ln_b": jnp.zeros((1, D), jnp.float32),
    }


if __name__ == "__main__":
    root = jax.random.PRNGKey(0)
    k_src, k_qry, k_spe, k_qpe, k_mask, k_ca, k_sa, k_ff = jax.random.split(root, 8)

    source = jax.random.normal(k_src, (NS, D), jnp.float32)
    query = jax.random.normal(k_qry, (NQ, D), jnp.float32)
    source_pe = jax.random.normal(k_spe, (NS, D), jnp.float32)
    query_pe = jax.random.normal(k_qpe, (NQ, D), jnp.float32)

    # two batches: first half of points/queries -> batch 0, second half -> batch 1
    source_batch = jnp.concatenate(
        [jnp.zeros((NS // 2,), jnp.int32), jnp.ones((NS // 2,), jnp.int32)])
    query_batch = jnp.concatenate(
        [jnp.zeros((NQ // 2,), jnp.int32), jnp.ones((NQ // 2,), jnp.int32)])

    # attn_mask: True == blocked (as in Mask3D); ~30% blocked
    attn_mask = (jax.random.uniform(k_mask, (NQ, NS)) < 0.3)

    params = {
        "cross": _attn_params(k_ca),
        "self": _attn_params(k_sa),
        "ffn": _ffn_params(k_ff),
    }

    fn = jax.jit(mask3d_decoder_block)
    out_source, out_query = fn(source, query, source_batch, query_batch,
                               source_pe, query_pe, attn_mask, params)
    jax.block_until_ready(out_query)

    ref_query = _reference_block(source, query, source_batch, query_batch,
                                 source_pe, query_pe, attn_mask, params)

    assert out_source.shape == (NS, D)
    assert out_query.shape == (NQ, D)
    assert bool(jnp.all(jnp.isfinite(out_query)))
    # loose tolerance: pl.reciprocal(approx=True) softmax denominator (~1e-3 rel)
    assert bool(jnp.allclose(out_query, ref_query, atol=3e-2, rtol=3e-2)), (
        float(jnp.max(jnp.abs(out_query - ref_query))))
    print("KERNEL_OK")
</pallas_src>

<mosaic_0001>
module attributes {stable_mosaic.version = 11 : i64} {
  func.func @mask3d_block_kernel(%arg0: memref<160x32xf32, #tpu.memory_space<vmem>>, %arg1: memref<32x64xf32, #tpu.memory_space<vmem>>, %arg2: memref<320x64xf32, #tpu.memory_space<vmem>>, %arg3: memref<16x64xf32, #tpu.memory_space<vmem>>, %arg4: memref<16x32xf32, #tpu.memory_space<vmem>>) attributes {dimension_semantics = [], scalar_prefetch = 0 : i64, scratch_operands = 0 : i64, tpu.core_type = #tpu.core_type<tc>} {
    %c0 = arith.constant 0 : index
    %c0_0 = arith.constant 0 : index
    %0 = vector.load %arg0[%c0, %c0_0] : memref<160x32xf32, #tpu.memory_space<vmem>>, vector<64x32xf32>
    %c64 = arith.constant 64 : index
    %c0_1 = arith.constant 0 : index
    %1 = vector.load %arg0[%c64, %c0_1] : memref<160x32xf32, #tpu.memory_space<vmem>>, vector<64x32xf32>
    %c128 = arith.constant 128 : index
    %c0_2 = arith.constant 0 : index
    %2 = vector.load %arg0[%c128, %c0_2] : memref<160x32xf32, #tpu.memory_space<vmem>>, vector<16x32xf32>
    %c144 = arith.constant 144 : index
    %c0_3 = arith.constant 0 : index
    %3 = vector.load %arg0[%c144, %c0_3] : memref<160x32xf32, #tpu.memory_space<vmem>>, vector<16x32xf32>
    %c0_4 = arith.constant 0 : index
    %c0_5 = arith.constant 0 : index
    %4 = vector.load %arg1[%c0_4, %c0_5] : memref<32x64xf32, #tpu.memory_space<vmem>>, vector<16x64xf32>
    %c16 = arith.constant 16 : index
    %c0_6 = arith.constant 0 : index
    %5 = vector.load %arg1[%c16, %c0_6] : memref<32x64xf32, #tpu.memory_space<vmem>>, vector<16x16xf32>
    %6 = arith.addf %2, %3 : vector<16x32xf32>
    %7 = arith.addf %0, %1 : vector<64x32xf32>
    %c0_7 = arith.constant 0 : index
    %c0_8 = arith.constant 0 : index
    %8 = vector.load %arg2[%c0_7, %c0_8] : memref<320x64xf32, #tpu.memory_space<vmem>>, vector<32x32xf32>
    %cst = arith.constant dense<0.000000e+00> : vector<16x32xf32>
    %9 = tpu.matmul %6, %8, %cst {dimension_numbers = #tpu.dot_dimension_numbers<[1], [0], [0], [1], [0, 0, 1, 1], [], []>} : vector<16x32xf32>, vector<32x32xf32>, vector<16x32xf32> -> vector<16x32xf32>
    %c0_9 = arith.constant 0 : index
    %c0_10 = arith.constant 0 : index
    %10 = vector.load %arg3[%c0_9, %c0_10] : memref<16x64xf32, #tpu.memory_space<vmem>>, vector<1x32xf32>
    %11 = vector.broadcast %10 : vector<1x32xf32> to vector<16x32xf32>
    %12 = arith.addf %9, %11 : vector<16x32xf32>
    %c32 = arith.constant 32 : index
    %c0_11 = arith.constant 0 : index
    %13 = vector.load %arg2[%c32, %c0_11] : memref<320x64xf32, #tpu.memory_space<vmem>>, vector<32x32xf32>
    %cst_12 = arith.constant dense<0.000000e+00> : vector<64x32xf32>
    %14 = tpu.matmul %7, %13, %cst_12 {dimension_numbers = #tpu.dot_dimension_numbers<[1], [0], [0], [1], [0, 0, 1, 1], [], []>} : vector<64x32xf32>, vector<32x32xf32>, vector<64x32xf32> -> vector<64x32xf32>
    %c1 = arith.constant 1 : index
    %c0_13 = arith.constant 0 : index
    %15 = vector.load %arg3[%c1, %c0_13] : memref<16x64xf32, #tpu.memory_space<vmem>>, vector<1x32xf32>
    %16 = vector.broadcast %15 : vector<1x32xf32> to vector<64x32xf32>
    %17 = arith.addf %14, %16 : vector<64x32xf32>
    %c64_14 = arith.constant 64 : index
    %c0_15 = arith.constant 0 : index
    %18 = vector.load %arg2[%c64_14, %c0_15] : memref<320x64xf32, #tpu.memory_space<vmem>>, vector<32x32xf32>
    %cst_16 = arith.constant dense<0.000000e+00> : vector<64x32xf32>
    %19 = tpu.matmul %0, %18, %cst_16 {dimension_numbers = #tpu.dot_dimension_numbers<[1], [0], [0], [1], [0, 0, 1, 1], [], []>} : vector<64x32xf32>, vector<32x32xf32>, vector<64x32xf32> -> vector<64x32xf32>
    %c2 = arith.constant 2 : index
    %c0_17 = arith.constant 0 : index
    %20 = vector.load %arg3[%c2, %c0_17] : memref<16x64xf32, #tpu.memory_space<vmem>>, vector<1x32xf32>
    %21 = vector.broadcast %20 : vector<1x32xf32> to vector<64x32xf32>
    %22 = arith.addf %19, %21 : vector<64x32xf32>
    %23 = vector.extract_strided_slice %12 {offsets = [0, 0], sizes = [16, 8], strides = [1, 1]} : vector<16x32xf32> to vector<16x8xf32>
    %24 = vector.extract_strided_slice %17 {offsets = [0, 0], sizes = [64, 8], strides = [1, 1]} : vector<64x32xf32> to vector<64x8xf32>
    %cst_18 = arith.constant dense<0.000000e+00> : vector<16x64xf32>
    %25 = tpu.matmul %23, %24, %cst_18 {dimension_numbers = #tpu.dot_dimension_numbers<[1], [1], [0], [0], [0, 0, 1, 0], [], []>} : vector<16x8xf32>, vector<64x8xf32>, vector<16x64xf32> -> vector<16x64xf32>
    %26 = arith.addf %25, %4 : vector<16x64xf32>
    %cst_19 = arith.constant dense<0xFF800000> : vector<16xf32>
    %27 = vector.multi_reduction <maximumf>, %26, %cst_19 [1] : vector<16x64xf32> to vector<16xf32>
    %28 = vector.shape_cast %27 : vector<16xf32> to vector<16x1xf32>
    %29 = vector.broadcast %28 : vector<16x1xf32> to vector<16x64xf32>
    %30 = arith.subf %26, %29 : vector<16x64xf32>
    %31 = math.exp %30 : vector<16x64xf32>
    %cst_20 = arith.constant dense<0.000000e+00> : vector<16xf32>
    %32 = vector.multi_reduction <add>, %31, %cst_20 [1] : vector<16x64xf32> to vector<16xf32>
    %33 = vector.shape_cast %32 : vector<16xf32> to vector<16x1xf32>
    %34 = tpu.reciprocal %33 {approx = true} : vector<16x1xf32> -> vector<16x1xf32>
    %35 = vector.broadcast %34 : vector<16x1xf32> to vector<16x64xf32>
    %36 = arith.mulf %31, %35 : vector<16x64xf32>
    %37 = vector.extract_strided_slice %22 {offsets = [0, 0], sizes = [64, 8], strides = [1, 1]} : vector<64x32xf32> to vector<64x8xf32>
    %cst_21 = arith.constant dense<0.000000e+00> : vector<16x8xf32>
    %38 = tpu.matmul %36, %37, %cst_21 {dimension_numbers = #tpu.dot_dimension_numbers<[1], [0], [0], [1], [0, 0, 1, 1], [], []>} : vector<16x64xf32>, vector<64x8xf32>, vector<16x8xf32> -> vector<16x8xf32>
    %39 = vector.extract_strided_slice %12 {offsets = [0, 8], sizes = [16, 8], strides = [1, 1]} : vector<16x32xf32> to vector<16x8xf32>
    %40 = vector.extract_strided_slice %17 {offsets = [0, 8], sizes = [64, 8], strides = [1, 1]} : vector<64x32xf32> to vector<64x8xf32>
    %cst_22 = arith.constant dense<0.000000e+00> : vector<16x64xf32>
    %41 = tpu.matmul %39, %40, %cst_22 {dimension_numbers = #tpu.dot_dimension_numbers<[1], [1], [0], [0], [0, 0, 1, 0], [], []>} : vector<16x8xf32>, vector<64x8xf32>, vector<16x64xf32> -> vector<16x64xf32>
    %42 = arith.addf %41, %4 : vector<16x64xf32>
    %cst_23 = arith.constant dense<0xFF800000> : vector<16xf32>
    %43 = vector.multi_reduction <maximumf>, %42, %cst_23 [1] : vector<16x64xf32> to vector<16xf32>
    %44 = vector.shape_cast %43 : vector<16xf32> to vector<16x1xf32>
    %45 = vector.broadcast %44 : vector<16x1xf32> to vector<16x64xf32>
    %46 = arith.subf %42, %45 : vector<16x64xf32>
    %47 = math.exp %46 : vector<16x64xf32>
    %cst_24 = arith.constant dense<0.000000e+00> : vector<16xf32>
    %48 = vector.multi_reduction <add>, %47, %cst_24 [1] : vector<16x64xf32> to vector<16xf32>
    %49 = vector.shape_cast %48 : vector<16xf32> to vector<16x1xf32>
    %50 = tpu.reciprocal %49 {approx = true} : vector<16x1xf32> -> vector<16x1xf32>
    %51 = vector.broadcast %50 : vector<16x1xf32> to vector<16x64xf32>
    %52 = arith.mulf %47, %51 : vector<16x64xf32>
    %53 = vector.extract_strided_slice %22 {offsets = [0, 8], sizes = [64, 8], strides = [1, 1]} : vector<64x32xf32> to vector<64x8xf32>
    %cst_25 = arith.constant dense<0.000000e+00> : vector<16x8xf32>
    %54 = tpu.matmul %52, %53, %cst_25 {dimension_numbers = #tpu.dot_dimension_numbers<[1], [0], [0], [1], [0, 0, 1, 1], [], []>} : vector<16x64xf32>, vector<64x8xf32>, vector<16x8xf32> -> vector<16x8xf32>
    %55 = vector.extract_strided_slice %12 {offsets = [0, 16], sizes = [16, 8], strides = [1, 1]} : vector<16x32xf32> to vector<16x8xf32>
    %56 = vector.extract_strided_slice %17 {offsets = [0, 16], sizes = [64, 8], strides = [1, 1]} : vector<64x32xf32> to vector<64x8xf32>
    %cst_26 = arith.constant dense<0.000000e+00> : vector<16x64xf32>
    %57 = tpu.matmul %55, %56, %cst_26 {dimension_numbers = #tpu.dot_dimension_numbers<[1], [1], [0], [0], [0, 0, 1, 0], [], []>} : vector<16x8xf32>, vector<64x8xf32>, vector<16x64xf32> -> vector<16x64xf32>
    %58 = arith.addf %57, %4 : vector<16x64xf32>
    %cst_27 = arith.constant dense<0xFF800000> : vector<16xf32>
    %59 = vector.multi_reduction <maximumf>, %58, %cst_27 [1] : vector<16x64xf32> to vector<16xf32>
    %60 = vector.shape_cast %59 : vector<16xf32> to vector<16x1xf32>
    %61 = vector.broadcast %60 : vector<16x1xf32> to vector<16x64xf32>
    %62 = arith.subf %58, %61 : vector<16x64xf32>
    %63 = math.exp %62 : vector<16x64xf32>
    %cst_28 = arith.constant dense<0.000000e+00> : vector<16xf32>
    %64 = vector.multi_reduction <add>, %63, %cst_28 [1] : vector<16x64xf32> to vector<16xf32>
    %65 = vector.shape_cast %64 : vector<16xf32> to vector<16x1xf32>
    %66 = tpu.reciprocal %65 {approx = true} : vector<16x1xf32> -> vector<16x1xf32>
    %67 = vector.broadcast %66 : vector<16x1xf32> to vector<16x64xf32>
    %68 = arith.mulf %63, %67 : vector<16x64xf32>
    %69 = vector.extract_strided_slice %22 {offsets = [0, 16], sizes = [64, 8], strides = [1, 1]} : vector<64x32xf32> to vector<64x8xf32>
    %cst_29 = arith.constant dense<0.000000e+00> : vector<16x8xf32>
    %70 = tpu.matmul %68, %69, %cst_29 {dimension_numbers = #tpu.dot_dimension_numbers<[1], [0], [0], [1], [0, 0, 1, 1], [], []>} : vector<16x64xf32>, vector<64x8xf32>, vector<16x8xf32> -> vector<16x8xf32>
    %71 = vector.extract_strided_slice %12 {offsets = [0, 24], sizes = [16, 8], strides = [1, 1]} : vector<16x32xf32> to vector<16x8xf32>
    %72 = vector.extract_strided_slice %17 {offsets = [0, 24], sizes = [64, 8], strides = [1, 1]} : vector<64x32xf32> to vector<64x8xf32>
    %cst_30 = arith.constant dense<0.000000e+00> : vector<16x64xf32>
    %73 = tpu.matmul %71, %72, %cst_30 {dimension_numbers = #tpu.dot_dimension_numbers<[1], [1], [0], [0], [0, 0, 1, 0], [], []>} : vector<16x8xf32>, vector<64x8xf32>, vector<16x64xf32> -> vector<16x64xf32>
    %74 = arith.addf %73, %4 : vector<16x64xf32>
    %cst_31 = arith.constant dense<0xFF800000> : vector<16xf32>
    %75 = vector.multi_reduction <maximumf>, %74, %cst_31 [1] : vector<16x64xf32> to vector<16xf32>
    %76 = vector.shape_cast %75 : vector<16xf32> to vector<16x1xf32>
    %77 = vector.broadcast %76 : vector<16x1xf32> to vector<16x64xf32>
    %78 = arith.subf %74, %77 : vector<16x64xf32>
    %79 = math.exp %78 : vector<16x64xf32>
    %cst_32 = arith.constant dense<0.000000e+00> : vector<16xf32>
    %80 = vector.multi_reduction <add>, %79, %cst_32 [1] : vector<16x64xf32> to vector<16xf32>
    %81 = vector.shape_cast %80 : vector<16xf32> to vector<16x1xf32>
    %82 = tpu.reciprocal %81 {approx = true} : vector<16x1xf32> -> vector<16x1xf32>
    %83 = vector.broadcast %82 : vector<16x1xf32> to vector<16x64xf32>
    %84 = arith.mulf %79, %83 : vector<16x64xf32>
    %85 = vector.extract_strided_slice %22 {offsets = [0, 24], sizes = [64, 8], strides = [1, 1]} : vector<64x32xf32> to vector<64x8xf32>
    %cst_33 = arith.constant dense<0.000000e+00> : vector<16x8xf32>
    %86 = tpu.matmul %84, %85, %cst_33 {dimension_numbers = #tpu.dot_dimension_numbers<[1], [0], [0], [1], [0, 0, 1, 1], [], []>} : vector<16x64xf32>, vector<64x8xf32>, vector<16x8xf32> -> vector<16x8xf32>
    %87 = tpu.concatenate %38, %54, %70, %86 in 1 : vector<16x8xf32>, vector<16x8xf32>, vector<16x8xf32>, vector<16x8xf32> -> vector<16x32xf32>
    %c96 = arith.constant 96 : index
    %c0_34 = arith.constant 0 : index
    %88 = vector.load %arg2[%c96, %c0_34] : memref<320x64xf32, #tpu.memory_space<vmem>>, vector<32x32xf32>
    %cst_35 = arith.constant dense<0.000000e+00> : vector<16x32xf32>
    %89 = tpu.matmul %87, %88, %cst_35 {dimension_numbers = #tpu.dot_dimension_numbers<[1], [0], [0], [1], [0, 0, 1, 1], [], []>} : vector<16x32xf32>, vector<32x32xf32>, vector<16x32xf32> -> vector<16x32xf32>
    %c3 = arith.constant 3 : index
    %c0_36 = arith.constant 0 : index
    %90 = vector.load %arg3[%c3, %c0_36] : memref<16x64xf32, #tpu.memory_space<vmem>>, vector<1x32xf32>
    %91 = vector.broadcast %90 : vector<1x32xf32> to vector<16x32xf32>
    %92 = arith.addf %89, %91 : vector<16x32xf32>
    %93 = arith.addf %2, %92 : vector<16x32xf32>
    %c4 = arith.constant 4 : index
    %c0_37 = arith.constant 0 : index
    %94 = vector.load %arg3[%c4, %c0_37] : memref<16x64xf32, #tpu.memory_space<vmem>>, vector<1x32xf32>
    %c5 = arith.constant 5 : index
    %c0_38 = arith.constant 0 : index
    %95 = vector.load %arg3[%c5, %c0_38] : memref<16x64xf32, #tpu.memory_space<vmem>>, vector<1x32xf32>
    %cst_39 = arith.constant dense<0.000000e+00> : vector<16xf32>
    %96 = vector.multi_reduction <add>, %93, %cst_39 [1] : vector<16x32xf32> to vector<16xf32>
    %97 = vector.shape_cast %96 : vector<16xf32> to vector<16x1xf32>
    %98 = arith.mulf %93, %93 : vector<16x32xf32>
    %cst_40 = arith.constant dense<0.000000e+00> : vector<16xf32>
    %99 = vector.multi_reduction <add>, %98, %cst_40 [1] : vector<16x32xf32> to vector<16xf32>
    %100 = vector.shape_cast %99 : vector<16xf32> to vector<16x1xf32>
    %cst_41 = arith.constant 3.125000e-02 : f32
    %101 = vector.broadcast %cst_41 : f32 to vector<16x1xf32>
    %102 = arith.mulf %97, %101 : vector<16x1xf32>
    %cst_42 = arith.constant 3.125000e-02 : f32
    %103 = vector.broadcast %cst_42 : f32 to vector<16x1xf32>
    %104 = arith.mulf %100, %103 : vector<16x1xf32>
    %105 = arith.mulf %102, %102 : vector<16x1xf32>
    %106 = arith.subf %104, %105 : vector<16x1xf32>
    %107 = vector.broadcast %102 : vector<16x1xf32> to vector<16x32xf32>
    %108 = arith.subf %93, %107 : vector<16x32xf32>
    %cst_43 = arith.constant 9.99999974E-6 : f32
    %109 = vector.broadcast %cst_43 : f32 to vector<16x1xf32>
    %110 = arith.addf %106, %109 : vector<16x1xf32>
    %111 = math.rsqrt %110 : vector<16x1xf32>
    %112 = vector.broadcast %111 : vector<16x1xf32> to vector<16x32xf32>
    %113 = arith.mulf %108, %112 : vector<16x32xf32>
    %114 = vector.broadcast %94 : vector<1x32xf32> to vector<16x32xf32>
    %115 = arith.mulf %113, %114 : vector<16x32xf32>
    %116 = vector.broadcast %95 : vector<1x32xf32> to vector<16x32xf32>
    %117 = arith.addf %115, %116 : vector<16x32xf32>
    %118 = arith.addf %117, %3 : vector<16x32xf32>
    %c128_44 = arith.constant 128 : index
    %c0_45 = arith.constant 0 : index
    %119 = vector.load %arg2[%c128_44, %c0_45] : memref<320x64xf32, #tpu.memory_space<vmem>>, vector<32x64xf32>
    %cst_46 = arith.constant dense<0.000000e+00> : vector<16x64xf32>
    %120 = tpu.matmul %118, %119, %cst_46 {dimension_numbers = #tpu.dot_dimension_numbers<[1], [0], [0], [1], [0, 0, 1, 1], [], []>} : vector<16x32xf32>, vector<32x64xf32>, vector<16x64xf32> -> vector<16x64xf32>
    %c6 = arith.constant 6 : index
    %c0_47 = arith.constant 0 : index
    %121 = vector.load %arg3[%c6, %c0_47] : memref<16x64xf32, #tpu.memory_space<vmem>>, vector<1x64xf32>
    %122 = vector.broadcast %121 : vector<1x64xf32> to vector<16x64xf32>
    %123 = arith.addf %120, %122 : vector<16x64xf32>
    %124 = vector.extract_strided_slice %123 {offsets = [0, 0], sizes = [16, 32], strides = [1, 1]} : vector<16x64xf32> to vector<16x32xf32>
    %125 = vector.extract_strided_slice %123 {offsets = [0, 32], sizes = [16, 32], strides = [1, 1]} : vector<16x64xf32> to vector<16x32xf32>
    %c160 = arith.constant 160 : index
    %c0_48 = arith.constant 0 : index
    %126 = vector.load %arg2[%c160, %c0_48] : memref<320x64xf32, #tpu.memory_space<vmem>>, vector<32x32xf32>
    %cst_49 = arith.constant dense<0.000000e+00> : vector<16x32xf32>
    %127 = tpu.matmul %117, %126, %cst_49 {dimension_numbers = #tpu.dot_dimension_numbers<[1], [0], [0], [1], [0, 0, 1, 1], [], []>} : vector<16x32xf32>, vector<32x32xf32>, vector<16x32xf32> -> vector<16x32xf32>
    %c7 = arith.constant 7 : index
    %c0_50 = arith.constant 0 : index
    %128 = vector.load %arg3[%c7, %c0_50] : memref<16x64xf32, #tpu.memory_space<vmem>>, vector<1x32xf32>
    %129 = vector.broadcast %128 : vector<1x32xf32> to vector<16x32xf32>
    %130 = arith.addf %127, %129 : vector<16x32xf32>
    %131 = vector.extract_strided_slice %124 {offsets = [0, 0], sizes = [16, 8], strides = [1, 1]} : vector<16x32xf32> to vector<16x8xf32>
    %132 = vector.extract_strided_slice %125 {offsets = [0, 0], sizes = [16, 8], strides = [1, 1]} : vector<16x32xf32> to vector<16x8xf32>
    %cst_51 = arith.constant dense<0.000000e+00> : vector<16x16xf32>
    %133 = tpu.matmul %131, %132, %cst_51 {dimension_numbers = #tpu.dot_dimension_numbers<[1], [1], [0], [0], [0, 0, 1, 0], [], []>} : vector<16x8xf32>, vector<16x8xf32>, vector<16x16xf32> -> vector<16x16xf32>
    %134 = arith.addf %133, %5 : vector<16x16xf32>
    %cst_52 = arith.constant dense<0xFF800000> : vector<16xf32>
    %135 = vector.multi_reduction <maximumf>, %134, %cst_52 [1] : vector<16x16xf32> to vector<16xf32>
    %136 = vector.shape_cast %135 : vector<16xf32> to vector<16x1xf32>
    %137 = vector.broadcast %136 : vector<16x1xf32> to vector<16x16xf32>
    %138 = arith.subf %134, %137 : vector<16x16xf32>
    %139 = math.exp %138 : vector<16x16xf32>
    %cst_53 = arith.constant dense<0.000000e+00> : vector<16xf32>
    %140 = vector.multi_reduction <add>, %139, %cst_53 [1] : vector<16x16xf32> to vector<16xf32>
    %141 = vector.shape_cast %140 : vector<16xf32> to vector<16x1xf32>
    %142 = tpu.reciprocal %141 {approx = true} : vector<16x1xf32> -> vector<16x1xf32>
    %143 = vector.broadcast %142 : vector<16x1xf32> to vector<16x16xf32>
    %144 = arith.mulf %139, %143 : vector<16x16xf32>
    %145 = vector.extract_strided_slice %130 {offsets = [0, 0], sizes = [16, 8], strides = [1, 1]} : vector<16x32xf32> to vector<16x8xf32>
    %cst_54 = arith.constant dense<0.000000e+00> : vector<16x8xf32>
    %146 = tpu.matmul %144, %145, %cst_54 {dimension_numbers = #tpu.dot_dimension_numbers<[1], [0], [0], [1], [0, 0, 1, 1], [], []>} : vector<16x16xf32>, vector<16x8xf32>, vector<16x8xf32> -> vector<16x8xf32>
    %147 = vector.extract_strided_slice %124 {offsets = [0, 8], sizes = [16, 8], strides = [1, 1]} : vector<16x32xf32> to vector<16x8xf32>
    %148 = vector.extract_strided_slice %125 {offsets = [0, 8], sizes = [16, 8], strides = [1, 1]} : vector<16x32xf32> to vector<16x8xf32>
    %cst_55 = arith.constant dense<0.000000e+00> : vector<16x16xf32>
    %149 = tpu.matmul %147, %148, %cst_55 {dimension_numbers = #tpu.dot_dimension_numbers<[1], [1], [0], [0], [0, 0, 1, 0], [], []>} : vector<16x8xf32>, vector<16x8xf32>, vector<16x16xf32> -> vector<16x16xf32>
    %150 = arith.addf %149, %5 : vector<16x16xf32>
    %cst_56 = arith.constant dense<0xFF800000> : vector<16xf32>
    %151 = vector.multi_reduction <maximumf>, %150, %cst_56 [1] : vector<16x16xf32> to vector<16xf32>
    %152 = vector.shape_cast %151 : vector<16xf32> to vector<16x1xf32>
    %153 = vector.broadcast %152 : vector<16x1xf32> to vector<16x16xf32>
    %154 = arith.subf %150, %153 : vector<16x16xf32>
    %155 = math.exp %154 : vector<16x16xf32>
    %cst_57 = arith.constant dense<0.000000e+00> : vector<16xf32>
    %156 = vector.multi_reduction <add>, %155, %cst_57 [1] : vector<16x16xf32> to vector<16xf32>
    %157 = vector.shape_cast %156 : vector<16xf32> to vector<16x1xf32>
    %158 = tpu.reciprocal %157 {approx = true} : vector<16x1xf32> -> vector<16x1xf32>
    %159 = vector.broadcast %158 : vector<16x1xf32> to vector<16x16xf32>
    %160 = arith.mulf %155, %159 : vector<16x16xf32>
    %161 = vector.extract_strided_slice %130 {offsets = [0, 8], sizes = [16, 8], strides = [1, 1]} : vector<16x32xf32> to vector<16x8xf32>
    %cst_58 = arith.constant dense<0.000000e+00> : vector<16x8xf32>
    %162 = tpu.matmul %160, %161, %cst_58 {dimension_numbers = #tpu.dot_dimension_numbers<[1], [0], [0], [1], [0, 0, 1, 1], [], []>} : vector<16x16xf32>, vector<16x8xf32>, vector<16x8xf32> -> vector<16x8xf32>
    %163 = vector.extract_strided_slice %124 {offsets = [0, 16], sizes = [16, 8], strides = [1, 1]} : vector<16x32xf32> to vector<16x8xf32>
    %164 = vector.extract_strided_slice %125 {offsets = [0, 16], sizes = [16, 8], strides = [1, 1]} : vector<16x32xf32> to vector<16x8xf32>
    %cst_59 = arith.constant dense<0.000000e+00> : vector<16x16xf32>
    %165 = tpu.matmul %163, %164, %cst_59 {dimension_numbers = #tpu.dot_dimension_numbers<[1], [1], [0], [0], [0, 0, 1, 0], [], []>} : vector<16x8xf32>, vector<16x8xf32>, vector<16x16xf32> -> vector<16x16xf32>
    %166 = arith.addf %165, %5 : vector<16x16xf32>
    %cst_60 = arith.constant dense<0xFF800000> : vector<16xf32>
    %167 = vector.multi_reduction <maximumf>, %166, %cst_60 [1] : vector<16x16xf32> to vector<16xf32>
    %168 = vector.shape_cast %167 : vector<16xf32> to vector<16x1xf32>
    %169 = vector.broadcast %168 : vector<16x1xf32> to vector<16x16xf32>
    %170 = arith.subf %166, %169 : vector<16x16xf32>
    %171 = math.exp %170 : vector<16x16xf32>
    %cst_61 = arith.constant dense<0.000000e+00> : vector<16xf32>
    %172 = vector.multi_reduction <add>, %171, %cst_61 [1] : vector<16x16xf32> to vector<16xf32>
    %173 = vector.shape_cast %172 : vector<16xf32> to vector<16x1xf32>
    %174 = tpu.reciprocal %173 {approx = true} : vector<16x1xf32> -> vector<16x1xf32>
    %175 = vector.broadcast %174 : vector<16x1xf32> to vector<16x16xf32>
    %176 = arith.mulf %171, %175 : vector<16x16xf32>
    %177 = vector.extract_strided_slice %130 {offsets = [0, 16], sizes = [16, 8], strides = [1, 1]} : vector<16x32xf32> to vector<16x8xf32>
    %cst_62 = arith.constant dense<0.000000e+00> : vector<16x8xf32>
    %178 = tpu.matmul %176, %177, %cst_62 {dimension_numbers = #tpu.dot_dimension_numbers<[1], [0], [0], [1], [0, 0, 1, 1], [], []>} : vector<16x16xf32>, vector<16x8xf32>, vector<16x8xf32> -> vector<16x8xf32>
    %179 = vector.extract_strided_slice %124 {offsets = [0, 24], sizes = [16, 8], strides = [1, 1]} : vector<16x32xf32> to vector<16x8xf32>
    %180 = vector.extract_strided_slice %125 {offsets = [0, 24], sizes = [16, 8], strides = [1, 1]} : vector<16x32xf32> to vector<16x8xf32>
    %cst_63 = arith.constant dense<0.000000e+00> : vector<16x16xf32>
    %181 = tpu.matmul %179, %180, %cst_63 {dimension_numbers = #tpu.dot_dimension_numbers<[1], [1], [0], [0], [0, 0, 1, 0], [], []>} : vector<16x8xf32>, vector<16x8xf32>, vector<16x16xf32> -> vector<16x16xf32>
    %182 = arith.addf %181, %5 : vector<16x16xf32>
    %cst_64 = arith.constant dense<0xFF800000> : vector<16xf32>
    %183 = vector.multi_reduction <maximumf>, %182, %cst_64 [1] : vector<16x16xf32> to vector<16xf32>
    %184 = vector.shape_cast %183 : vector<16xf32> to vector<16x1xf32>
    %185 = vector.broadcast %184 : vector<16x1xf32> to vector<16x16xf32>
    %186 = arith.subf %182, %185 : vector<16x16xf32>
    %187 = math.exp %186 : vector<16x16xf32>
    %cst_65 = arith.constant dense<0.000000e+00> : vector<16xf32>
    %188 = vector.multi_reduction <add>, %187, %cst_65 [1] : vector<16x16xf32> to vector<16xf32>
    %189 = vector.shape_cast %188 : vector<16xf32> to vector<16x1xf32>
    %190 = tpu.reciprocal %189 {approx = true} : vector<16x1xf32> -> vector<16x1xf32>
    %191 = vector.broadcast %190 : vector<16x1xf32> to vector<16x16xf32>
    %192 = arith.mulf %187, %191 : vector<16x16xf32>
    %193 = vector.extract_strided_slice %130 {offsets = [0, 24], sizes = [16, 8], strides = [1, 1]} : vector<16x32xf32> to vector<16x8xf32>
    %cst_66 = arith.constant dense<0.000000e+00> : vector<16x8xf32>
    %194 = tpu.matmul %192, %193, %cst_66 {dimension_numbers = #tpu.dot_dimension_numbers<[1], [0], [0], [1], [0, 0, 1, 1], [], []>} : vector<16x16xf32>, vector<16x8xf32>, vector<16x8xf32> -> vector<16x8xf32>
    %195 = tpu.concatenate %146, %162, %178, %194 in 1 : vector<16x8xf32>, vector<16x8xf32>, vector<16x8xf32>, vector<16x8xf32> -> vector<16x32xf32>
    %c192 = arith.constant 192 : index
    %c0_67 = arith.constant 0 : index
    %196 = vector.load %arg2[%c192, %c0_67] : memref<320x64xf32, #tpu.memory_space<vmem>>, vector<32x32xf32>
    %cst_68 = arith.constant dense<0.000000e+00> : vector<16x32xf32>
    %197 = tpu.matmul %195, %196, %cst_68 {dimension_numbers = #tpu.dot_dimension_numbers<[1], [0], [0], [1], [0, 0, 1, 1], [], []>} : vector<16x32xf32>, vector<32x32xf32>, vector<16x32xf32> -> vector<16x32xf32>
    %c8 = arith.constant 8 : index
    %c0_69 = arith.constant 0 : index
    %198 = vector.load %arg3[%c8, %c0_69] : memref<16x64xf32, #tpu.memory_space<vmem>>, vector<1x32xf32>
    %199 = vector.broadcast %198 : vector<1x32xf32> to vector<16x32xf32>
    %200 = arith.addf %197, %199 : vector<16x32xf32>
    %201 = arith.addf %117, %200 : vector<16x32xf32>
    %c9 = arith.constant 9 : index
    %c0_70 = arith.constant 0 : index
    %202 = vector.load %arg3[%c9, %c0_70] : memref<16x64xf32, #tpu.memory_space<vmem>>, vector<1x32xf32>
    %c10 = arith.constant 10 : index
    %c0_71 = arith.constant 0 : index
    %203 = vector.load %arg3[%c10, %c0_71] : memref<16x64xf32, #tpu.memory_space<vmem>>, vector<1x32xf32>
    %cst_72 = arith.constant dense<0.000000e+00> : vector<16xf32>
    %204 = vector.multi_reduction <add>, %201, %cst_72 [1] : vector<16x32xf32> to vector<16xf32>
    %205 = vector.shape_cast %204 : vector<16xf32> to vector<16x1xf32>
    %206 = arith.mulf %201, %201 : vector<16x32xf32>
    %cst_73 = arith.constant dense<0.000000e+00> : vector<16xf32>
    %207 = vector.multi_reduction <add>, %206, %cst_73 [1] : vector<16x32xf32> to vector<16xf32>
    %208 = vector.shape_cast %207 : vector<16xf32> to vector<16x1xf32>
    %cst_74 = arith.constant 3.125000e-02 : f32
    %209 = vector.broadcast %cst_74 : f32 to vector<16x1xf32>
    %210 = arith.mulf %205, %209 : vector<16x1xf32>
    %cst_75 = arith.constant 3.125000e-02 : f32
    %211 = vector.broadcast %cst_75 : f32 to vector<16x1xf32>
    %212 = arith.mulf %208, %211 : vector<16x1xf32>
    %213 = arith.mulf %210, %210 : vector<16x1xf32>
    %214 = arith.subf %212, %213 : vector<16x1xf32>
    %215 = vector.broadcast %210 : vector<16x1xf32> to vector<16x32xf32>
    %216 = arith.subf %201, %215 : vector<16x32xf32>
    %cst_76 = arith.constant 9.99999974E-6 : f32
    %217 = vector.broadcast %cst_76 : f32 to vector<16x1xf32>
    %218 = arith.addf %214, %217 : vector<16x1xf32>
    %219 = math.rsqrt %218 : vector<16x1xf32>
    %220 = vector.broadcast %219 : vector<16x1xf32> to vector<16x32xf32>
    %221 = arith.mulf %216, %220 : vector<16x32xf32>
    %222 = vector.broadcast %202 : vector<1x32xf32> to vector<16x32xf32>
    %223 = arith.mulf %221, %222 : vector<16x32xf32>
    %224 = vector.broadcast %203 : vector<1x32xf32> to vector<16x32xf32>
    %225 = arith.addf %223, %224 : vector<16x32xf32>
    %c224 = arith.constant 224 : index
    %c0_77 = arith.constant 0 : index
    %226 = vector.load %arg2[%c224, %c0_77] : memref<320x64xf32, #tpu.memory_space<vmem>>, vector<32x64xf32>
    %cst_78 = arith.constant dense<0.000000e+00> : vector<16x64xf32>
    %227 = tpu.matmul %225, %226, %cst_78 {dimension_numbers = #tpu.dot_dimension_numbers<[1], [0], [0], [1], [0, 0, 1, 1], [], []>} : vector<16x32xf32>, vector<32x64xf32>, vector<16x64xf32> -> vector<16x64xf32>
    %c11 = arith.constant 11 : index
    %c0_79 = arith.constant 0 : index
    %228 = vector.load %arg3[%c11, %c0_79] : memref<16x64xf32, #tpu.memory_space<vmem>>, vector<1x64xf32>
    %229 = vector.broadcast %228 : vector<1x64xf32> to vector<16x64xf32>
    %230 = arith.addf %227, %229 : vector<16x64xf32>
    %cst_80 = arith.constant 0.000000e+00 : f32
    %231 = vector.broadcast %cst_80 : f32 to vector<16x64xf32>
    %232 = arith.maximumf %230, %231 : vector<16x64xf32>
    %c256 = arith.constant 256 : index
    %c0_81 = arith.constant 0 : index
    %233 = vector.load %arg2[%c256, %c0_81] : memref<320x64xf32, #tpu.memory_space<vmem>>, vector<64x32xf32>
    %cst_82 = arith.constant dense<0.000000e+00> : vector<16x32xf32>
    %234 = tpu.matmul %232, %233, %cst_82 {dimension_numbers = #tpu.dot_dimension_numbers<[1], [0], [0], [1], [0, 0, 1, 1], [], []>} : vector<16x64xf32>, vector<64x32xf32>, vector<16x32xf32> -> vector<16x32xf32>
    %c12 = arith.constant 12 : index
    %c0_83 = arith.constant 0 : index
    %235 = vector.load %arg3[%c12, %c0_83] : memref<16x64xf32, #tpu.memory_space<vmem>>, vector<1x32xf32>
    %236 = vector.broadcast %235 : vector<1x32xf32> to vector<16x32xf32>
    %237 = arith.addf %234, %236 : vector<16x32xf32>
    %238 = arith.addf %225, %237 : vector<16x32xf32>
    %c13 = arith.constant 13 : index
    %c0_84 = arith.constant 0 : index
    %239 = vector.load %arg3[%c13, %c0_84] : memref<16x64xf32, #tpu.memory_space<vmem>>, vector<1x32xf32>
    %c14 = arith.constant 14 : index
    %c0_85 = arith.constant 0 : index
    %240 = vector.load %arg3[%c14, %c0_85] : memref<16x64xf32, #tpu.memory_space<vmem>>, vector<1x32xf32>
    %cst_86 = arith.constant dense<0.000000e+00> : vector<16xf32>
    %241 = vector.multi_reduction <add>, %238, %cst_86 [1] : vector<16x32xf32> to vector<16xf32>
    %242 = vector.shape_cast %241 : vector<16xf32> to vector<16x1xf32>
    %243 = arith.mulf %238, %238 : vector<16x32xf32>
    %cst_87 = arith.constant dense<0.000000e+00> : vector<16xf32>
    %244 = vector.multi_reduction <add>, %243, %cst_87 [1] : vector<16x32xf32> to vector<16xf32>
    %245 = vector.shape_cast %244 : vector<16xf32> to vector<16x1xf32>
    %cst_88 = arith.constant 3.125000e-02 : f32
    %246 = vector.broadcast %cst_88 : f32 to vector<16x1xf32>
    %247 = arith.mulf %242, %246 : vector<16x1xf32>
    %cst_89 = arith.constant 3.125000e-02 : f32
    %248 = vector.broadcast %cst_89 : f32 to vector<16x1xf32>
    %249 = arith.mulf %245, %248 : vector<16x1xf32>
    %250 = arith.mulf %247, %247 : vector<16x1xf32>
    %251 = arith.subf %249, %250 : vector<16x1xf32>
    %252 = vector.broadcast %247 : vector<16x1xf32> to vector<16x32xf32>
    %253 = arith.subf %238, %252 : vector<16x32xf32>
    %cst_90 = arith.constant 9.99999974E-6 : f32
    %254 = vector.broadcast %cst_90 : f32 to vector<16x1xf32>
    %255 = arith.addf %251, %254 : vector<16x1xf32>
    %256 = math.rsqrt %255 : vector<16x1xf32>
    %257 = vector.broadcast %256 : vector<16x1xf32> to vector<16x32xf32>
    %258 = arith.mulf %253, %257 : vector<16x32xf32>
    %259 = vector.broadcast %239 : vector<1x32xf32> to vector<16x32xf32>
    %260 = arith.mulf %258, %259 : vector<16x32xf32>
    %261 = vector.broadcast %240 : vector<1x32xf32> to vector<16x32xf32>
    %262 = arith.addf %260, %261 : vector<16x32xf32>
    %c0_91 = arith.constant 0 : index
    %c0_92 = arith.constant 0 : index
    %263 = vector.load %arg4[%c0_91, %c0_92] : memref<16x32xf32, #tpu.memory_space<vmem>>, vector<16x32xf32>
    tpu.vector_store %arg4[%c0_91, %c0_92], %262 {strides = array<i32>} : memref<16x32xf32, #tpu.memory_space<vmem>>, vector<16x32xf32>,
    return
  }
}

</mosaic_0001>

<llo_original>
// kernel: mask3d_decoder_block.1
$region0: #{mask3d_decoder_block.1}
  #allocation0 [shape = 'u32[]', space=smem, size = 0x4, offset = 0x4, fixed_abs, tag = 'smem constant byte address 0x4 - core index']
  #allocation1 [shape = 'u32[72,128]{1,0:T(1,128)}', space=vmem, size = 0x9000, scoped, tag = 'internal scratch']
  %s0 = inlined_call_operand.vmem [shape: f32[160,32], index: 0, kind: input, shape index: {}]
  %s1 = inlined_call_operand.vmem [shape: f32[32,64], index: 1, kind: input, shape index: {}]
  %s2 = inlined_call_operand.vmem [shape: f32[320,64], index: 2, kind: input, shape index: {}]
  %s3 = inlined_call_operand.vmem [shape: f32[16,64], index: 3, kind: input, shape index: {}]
  %s4 = inlined_call_operand.hbm [shape: f32[16,32], index: 4, kind: output, shape index: {}]
  %s5 = sld [smem:[#allocation0]]
  $region26: #{mask3d_decoder_block.1} parent=0
    _
  %s7 = ssub.s32 1, %s5
  %s8 = scalar_select 0, %s7, %s5
  $region1: #{mask3d_decoder_block.1} parent=0
    #allocation2 [shape = 'u8[8192]{0}', space=vmem, size = 0x2000, scoped, tag = 'output window, operand 0, single buffered']
    #allocation3 [shape = 's32[1]{0}', space=sflag, size = 0x4, scoped, tag = 'scoped memory for mask3d_decoder_block.1']
    %9 = vsyncpa [#allocation3], 0
    // Predicated region
    $region2: #{mask3d_decoder_block.1} parent=1 // pred_check
      _
    $region3: #{mask3d_decoder_block.1} parent=1 // pred_check_branch
      %11 = sbr.rel (0) target = $region5
    $region4: #{mask3d_decoder_block.1} parent=1 // pred_region
      _
    $region5: #{mask3d_decoder_block.1} parent=1 // pred_fallthru
      _
    // Predicated region
    $region6: #{mask3d_decoder_block.1} parent=1 // pred_check
      _
    $region7: #{mask3d_decoder_block.1} parent=1 // pred_check_branch
      %13 = sbr.rel (0) target = $region9
    $region8: #{mask3d_decoder_block.1} parent=1 // pred_region
      _
    $region9: #{mask3d_decoder_block.1} parent=1 // pred_fallthru
      _
    // Predicated region
    $region10: #{mask3d_decoder_block.1} parent=1 // pred_check
      _
    $region11: #{mask3d_decoder_block.1} parent=1 // pred_check_branch
      %15 = sbr.rel (0) target = $region13
    $region12: #{mask3d_decoder_block.1} parent=1 // pred_region
      _
    $region13: #{mask3d_decoder_block.1} parent=1 // pred_fallthru
      _
    // Predicated region
    $region14: #{mask3d_decoder_block.1} parent=1 // pred_check
      _
    $region15: #{mask3d_decoder_block.1} parent=1 // pred_check_branch
      %17 = sbr.rel (0) target = $region17
    $region16: #{mask3d_decoder_block.1} parent=1 // pred_region
      _
    $region17: #{mask3d_decoder_block.1} parent=1 // pred_fallthru
      _
    %v18 = vld [vmem:[%s0] sm:$0xff]
    %v19 = vld [vmem:[%s0 + $0x8] sm:$0xff]
    %v20 = vld [vmem:[%s0 + $0x10] sm:$0xff]
    %v21 = vld [vmem:[%s0 + $0x18] sm:$0xff]
    %v22 = vld [vmem:[%s0 + $0x20] sm:$0xff]
    %v23 = vld [vmem:[%s0 + $0x28] sm:$0xff]
    %v24 = vld [vmem:[%s0 + $0x30] sm:$0xff]
    %v25 = vld [vmem:[%s0 + $0x38] sm:$0xff]
    %v26 = vld [vmem:[%s0 + $0x40] sm:$0xff]
    %v27 = vld [vmem:[%s0 + $0x48] sm:$0xff]
    %v28 = vld [vmem:[%s0 + $0x50] sm:$0xff]
    %v29 = vld [vmem:[%s0 + $0x58] sm:$0xff]
    %v30 = vld [vmem:[%s0 + $0x60] sm:$0xff]
    %v31 = vld [vmem:[%s0 + $0x68] sm:$0xff]
    %v32 = vld [vmem:[%s0 + $0x70] sm:$0xff]
    %v33 = vld [vmem:[%s0 + $0x78] sm:$0xff]
    %v34 = vld [vmem:[%s0 + $0x80] sm:$0xff]
    %v35 = vld [vmem:[%s0 + $0x88] sm:$0xff]
    %v36 = vld [vmem:[%s0 + $0x90] sm:$0xff]
    %v37 = vld [vmem:[%s0 + $0x98] sm:$0xff]
    %v38 = vld [vmem:[%s1] sm:$0xff]
    %v39 = vld [vmem:[%s1 + $0x8] sm:$0xff]
    %v40 = vld [vmem:[%s1 + $0x10] sm:$0xff]
    %v41 = vld [vmem:[%s1 + $0x18] sm:$0xff]
    %v42 = vadd.f32 %v34, %v36
    %v43 = vadd.f32 %v35, %v37
    %v44 = vadd.f32 %v18, %v26
    %v45 = vadd.f32 %v19, %v27
    %v46 = vadd.f32 %v20, %v28
    %v47 = vadd.f32 %v21, %v29
    %v48 = vadd.f32 %v22, %v30
    %v49 = vadd.f32 %v23, %v31
    %v50 = vadd.f32 %v24, %v32
    %v51 = vadd.f32 %v25, %v33
    %v52 = vld [vmem:[%s2] sm:$0xff]
    %v53 = vld [vmem:[%s2 + $0x8] sm:$0xff]
    %v54 = vld [vmem:[%s2 + $0x10] sm:$0xff]
    %v55 = vld [vmem:[%s2 + $0x18] sm:$0xff]
    %v56 = vld [vmem:[%s3] sm:$0x1]
    %v57 = vperm.slane %v56, 0
    %vm58 = vcmask 261120
    %v60 = vsel %vm58, %v42, 0
    %v63 = vsel %vm58, %v43, 0
    %65 = vmatpush.msra.mxu0 0.0
    %66 = vmatpush.msra.mxu0 0.0
    %67 = vmatpush.msra.mxu0 0.0
    %68 = vmatpush.msra.mxu0 0.0
    %69 = vmatpush.msra.mxu0 0.0
    %70 = vmatpush.msra.mxu0 0.0
    %71 = vmatpush.msra.mxu0 0.0
    %72 = vmatpush.msra.mxu0 0.0
    %73 = vmatpush.msra.mxu0 0.0
    %74 = vmatpush.msra.mxu0 0.0
    %75 = vmatpush.msra.mxu0 0.0
    %76 = vmatpush.msra.mxu0 0.0
    %77 = vmatpush.msra.mxu0 %v55
    %78 = vmatpush.msra.mxu0 %v54
    %79 = vmatpush.msra.mxu0 %v53
    %80 = vmatpush.msra.mxu0 %v52
    %81 = vmatmul.f32.gmra.mxu0 %v60
    %v82 = vpop.f32.mrf.mxu0
    %v83 = vadd.f32 %v57, %v82
    %84 = vmatmul.f32.gmra.mxu0 %v63
    %v85 = vpop.f32.mrf.mxu0
    %v86 = vadd.f32 %v57, %v85
    %87 = vdwg.mxu0
    %v88 = vld [vmem:[%s2 + $0x20] sm:$0xff]
    %v89 = vld [vmem:[%s2 + $0x28] sm:$0xff]
    %v90 = vld [vmem:[%s2 + $0x30] sm:$0xff]
    %v91 = vld [vmem:[%s2 + $0x38] sm:$0xff]
    %v92 = vld [vmem:[%s3 + $0x1] sm:$0x1]
    %v93 = vperm.slane %v92, 0
    %v95 = vsel %vm58, %v44, 0
    %v98 = vsel %vm58, %v45, 0
    %v101 = vsel %vm58, %v46, 0
    %v104 = vsel %vm58, %v47, 0
    %v107 = vsel %vm58, %v48, 0
    %v110 = vsel %vm58, %v49, 0
    %v113 = vsel %vm58, %v50, 0
    %v116 = vsel %vm58, %v51, 0
    %118 = vmatpush.msra.mxu0 0.0
    %119 = vmatpush.msra.mxu0 0.0
    %120 = vmatpush.msra.mxu0 0.0
    %121 = vmatpush.msra.mxu0 0.0
    %122 = vmatpush.msra.mxu0 0.0
    %123 = vmatpush.msra.mxu0 0.0
    %124 = vmatpush.msra.mxu0 0.0
    %125 = vmatpush.msra.mxu0 0.0
    %126 = vmatpush.msra.mxu0 0.0
    %127 = vmatpush.msra.mxu0 0.0
    %128 = vmatpush.msra.mxu0 0.0
    %129 = vmatpush.msra.mxu0 0.0
    %130 = vmatpush.msra.mxu0 %v91
    %131 = vmatpush.msra.mxu0 %v90
    %132 = vmatpush.msra.mxu0 %v89
    %133 = vmatpush.msra.mxu0 %v88
    %134 = vmatmul.f32.gmra.mxu0 %v95
    %v135 = vpop.f32.mrf.mxu0
    %v136 = vadd.f32 %v93, %v135
    %137 = vmatmul.f32.gmra.mxu0 %v98
    %v138 = vpop.f32.mrf.mxu0
    %v139 = vadd.f32 %v93, %v138
    %140 = vmatmul.f32.gmra.mxu0 %v101
    %v141 = vpop.f32.mrf.mxu0
    %v142 = vadd.f32 %v93, %v141
    %143 = vmatmul.f32.gmra.mxu0 %v104
    %v144 = vpop.f32.mrf.mxu0
    %v145 = vadd.f32 %v93, %v144
    %146 = vmatmul.f32.gmra.mxu0 %v107
    %v147 = vpop.f32.mrf.mxu0
    %v148 = vadd.f32 %v93, %v147
    %149 = vmatmul.f32.gmra.mxu0 %v110
    %v150 = vpop.f32.mrf.mxu0
    %v151 = vadd.f32 %v93, %v150
    %152 = vmatmul.f32.gmra.mxu0 %v113
    %v153 = vpop.f32.mrf.mxu0
    %v154 = vadd.f32 %v93, %v153
    %155 = vmatmul.f32.gmra.mxu0 %v116
    %v156 = vpop.f32.mrf.mxu0
    %v157 = vadd.f32 %v93, %v156
    %158 = vdwg.mxu0
    %v159 = vld [vmem:[%s2 + $0x40] sm:$0xff]
    %v160 = vld [vmem:[%s2 + $0x48] sm:$0xff]
    %v161 = vld [vmem:[%s2 + $0x50] sm:$0xff]
    %v162 = vld [vmem:[%s2 + $0x58] sm:$0xff]
    %v163 = vld [vmem:[%s3 + $0x2] sm:$0x1]
    %v164 = vperm.slane %v163, 0
    %v166 = vsel %vm58, %v18, 0
    %v169 = vsel %vm58, %v19, 0
    %v172 = vsel %vm58, %v20, 0
    %v175 = vsel %vm58, %v21, 0
    %v178 = vsel %vm58, %v22, 0
    %v181 = vsel %vm58, %v23, 0
    %v184 = vsel %vm58, %v24, 0
    %v187 = vsel %vm58, %v25, 0
    %189 = vmatpush.msra.mxu0 0.0
    %190 = vmatpush.msra.mxu0 0.0
    %191 = vmatpush.msra.mxu0 0.0
    %192 = vmatpush.msra.mxu0 0.0
    %193 = vmatpush.msra.mxu0 0.0
    %194 = vmatpush.msra.mxu0 0.0
    %195 = vmatpush.msra.mxu0 0.0
    %196 = vmatpush.msra.mxu0 0.0
    %197 = vmatpush.msra.mxu0 0.0
    %198 = vmatpush.msra.mxu0 0.0
    %199 = vmatpush.msra.mxu0 0.0
    %200 = vmatpush.msra.mxu0 0.0
    %201 = vmatpush.msra.mxu0 %v162
    %202 = vmatpush.msra.mxu0 %v161
    %203 = vmatpush.msra.mxu0 %v160
    %204 = vmatpush.msra.mxu0 %v159
    %205 = vmatmul.f32.gmra.mxu0 %v166
    %v206 = vpop.f32.mrf.mxu0
    %v207 = vadd.f32 %v164, %v206
    %208 = vmatmul.f32.gmra.mxu0 %v169
    %v209 = vpop.f32.mrf.mxu0
    %v210 = vadd.f32 %v164, %v209
    %211 = vmatmul.f32.gmra.mxu0 %v172
    %v212 = vpop.f32.mrf.mxu0
    %v213 = vadd.f32 %v164, %v212
    %214 = vmatmul.f32.gmra.mxu0 %v175
    %v215 = vpop.f32.mrf.mxu0
    %v216 = vadd.f32 %v164, %v215
    %217 = vmatmul.f32.gmra.mxu0 %v178
    %v218 = vpop.f32.mrf.mxu0
    %v219 = vadd.f32 %v164, %v218
    %220 = vmatmul.f32.gmra.mxu0 %v181
    %v221 = vpop.f32.mrf.mxu0
    %v222 = vadd.f32 %v164, %v221
    %223 = vmatmul.f32.gmra.mxu0 %v184
    %v224 = vpop.f32.mrf.mxu0
    %v225 = vadd.f32 %v164, %v224
    %226 = vmatmul.f32.gmra.mxu0 %v187
    %v227 = vpop.f32.mrf.mxu0
    %v228 = vadd.f32 %v164, %v227
    %229 = vdwg.mxu0
    %vm230 = vcmask 64512
    %v232 = vsel %vm230, %v83, 0
    %v235 = vsel %vm230, %v86, 0
    %v238 = vsel %vm230, %v136, 0
    %v241 = vsel %vm230, %v139, 0
    %v244 = vsel %vm230, %v142, 0
    %v247 = vsel %vm230, %v145, 0
    %v250 = vsel %vm230, %v148, 0
    %v253 = vsel %vm230, %v151, 0
    %v256 = vsel %vm230, %v154, 0
    %v259 = vsel %vm230, %v157, 0
    %261 = vmatpush.xpose.msra.mxu0 0.0
    %262 = vmatpush.xpose.msra.mxu0 0.0
    %263 = vmatpush.xpose.msra.mxu0 0.0
    %264 = vmatpush.xpose.msra.mxu0 0.0
    %265 = vmatpush.xpose.msra.mxu0 0.0
    %266 = vmatpush.xpose.msra.mxu0 0.0
    %267 = vmatpush.xpose.msra.mxu0 0.0
    %268 = vmatpush.xpose.msra.mxu0 0.0
    %269 = vmatpush.xpose.msra.mxu0 %v259
    %270 = vmatpush.xpose.msra.mxu0 %v256
    %271 = vmatpush.xpose.msra.mxu0 %v253
    %272 = vmatpush.xpose.msra.mxu0 %v250
    %273 = vmatpush.xpose.msra.mxu0 %v247
    %274 = vmatpush.xpose.msra.mxu0 %v244
    %275 = vmatpush.xpose.msra.mxu0 %v241
    %276 = vmatpush.xpose.msra.mxu0 %v238
    %277 = vmatmul.f32.gmra.mxu0 %v232
    %v278 = vpop.f32.mrf.mxu0
    %v279 = vadd.f32 %v38, %v278
    %280 = vmatmul.f32.gmra.mxu0 %v235
    %v281 = vpop.f32.mrf.mxu0
    %v282 = vadd.f32 %v39, %v281
    %283 = vdwg.mxu0
    %vm284 = vcmask 523264
    %v285 = vsel %vm284, %v279, -inf
    %286 = vmax.xlane.f32.xlu0 %v285
    %v287 = vpop.xlane.xlu0 %286
    %v288 = vsel %vm284, %v282, -inf
    %289 = vmax.xlane.f32.xlu0 %v288
    %v290 = vpop.xlane.xlu0 %289
    %v291 = vsub.f32 %v279, %v287
    %v292 = vsub.f32 %v282, %v290
    %v293 = vmul.f32 %v291, 1.442695
    %v294 = vpow.pop %v293
    %v295 = vmul.f32 %v292, 1.442695
    %v296 = vpow.pop %v295
    %v297 = vsel %vm284, %v294, 0.0
    %298 = vadd.xlane.f32.xlu0 %v297
    %v299 = vpop.xlane.xlu0 %298
    %v300 = vsel %vm284, %v296, 0.0
    %301 = vadd.xlane.f32.xlu0 %v300
    %v302 = vpop.xlane.xlu0 %301
    %v303 = vrcp.pop %v299
    %v304 = vrcp.pop %v302
    %v305 = vmul.f32 %v294, %v303
    %v306 = vmul.f32 %v296, %v304
    %v308 = vsel %vm284, %v305, 0
    %v311 = vsel %vm284, %v306, 0
    %313 = vmatpush.msra.mxu0 0.0
    %314 = vmatpush.msra.mxu0 0.0
    %315 = vmatpush.msra.mxu0 0.0
    %316 = vmatpush.msra.mxu0 0.0
    %317 = vmatpush.msra.mxu0 0.0
    %318 = vmatpush.msra.mxu0 0.0
    %319 = vmatpush.msra.mxu0 0.0
    %320 = vmatpush.msra.mxu0 0.0
    %321 = vmatpush.msra.mxu0 %v228
    %322 = vmatpush.msra.mxu0 %v225
    %323 = vmatpush.msra.mxu0 %v222
    %324 = vmatpush.msra.mxu0 %v219
    %325 = vmatpush.msra.mxu0 %v216
    %326 = vmatpush.msra.mxu0 %v213
    %327 = vmatpush.msra.mxu0 %v210
    %328 = vmatpush.msra.mxu0 %v207
    %329 = vmatmul.f32.gmra.mxu0 %v308
    %v330 = vpop.f32.mrf.mxu0
    %v331 = vadd.f32 0.0, %v330
    %332 = vmatmul.f32.gmra.mxu0 %v311
    %v333 = vpop.f32.mrf.mxu0
    %v334 = vadd.f32 0.0, %v333
    %335 = vdwg.mxu0
    %336 = vrot.lane.b32.xlu0 %v83, 120
    %v337 = vpop.permute.xlu0 %336
    %338 = vrot.lane.b32.xlu0 %v86, 120
    %v339 = vpop.permute.xlu0 %338
    %340 = vrot.lane.b32.xlu0 %v136, 120
    %v341 = vpop.permute.xlu0 %340
    %342 = vrot.lane.b32.xlu0 %v139, 120
    %v343 = vpop.permute.xlu0 %342
    %344 = vrot.lane.b32.xlu0 %v142, 120
    %v345 = vpop.permute.xlu0 %344
    %346 = vrot.lane.b32.xlu0 %v145, 120
    %v347 = vpop.permute.xlu0 %346
    %348 = vrot.lane.b32.xlu0 %v148, 120
    %v349 = vpop.permute.xlu0 %348
    %350 = vrot.lane.b32.xlu0 %v151, 120
    %v351 = vpop.permute.xlu0 %350
    %352 = vrot.lane.b32.xlu0 %v154, 120
    %v353 = vpop.permute.xlu0 %352
    %354 = vrot.lane.b32.xlu0 %v157, 120
    %v355 = vpop.permute.xlu0 %354
    %v356 = vsel %vm230, %v337, 0
    %v358 = vsel %vm230, %v339, 0
    %v360 = vsel %vm230, %v341, 0
    %v362 = vsel %vm230, %v343, 0
    %v364 = vsel %vm230, %v345, 0
    %v366 = vsel %vm230, %v347, 0
    %v368 = vsel %vm230, %v349, 0
    %v370 = vsel %vm230, %v351, 0
    %v372 = vsel %vm230, %v353, 0
    %v374 = vsel %vm230, %v355, 0
    %376 = vmatpush.xpose.msra.mxu0 0.0
    %377 = vmatpush.xpose.msra.mxu0 0.0
    %378 = vmatpush.xpose.msra.mxu0 0.0
    %379 = vmatpush.xpose.msra.mxu0 0.0
    %380 = vmatpush.xpose.msra.mxu0 0.0
    %381 = vmatpush.xpose.msra.mxu0 0.0
    %382 = vmatpush.xpose.msra.mxu0 0.0
    %383 = vmatpush.xpose.msra.mxu0 0.0
    %384 = vmatpush.xpose.msra.mxu0 %v374
    %385 = vmatpush.xpose.msra.mxu0 %v372
    %386 = vmatpush.xpose.msra.mxu0 %v370
    %387 = vmatpush.xpose.msra.mxu0 %v368
    %388 = vmatpush.xpose.msra.mxu0 %v366
    %389 = vmatpush.xpose.msra.mxu0 %v364
    %390 = vmatpush.xpose.msra.mxu0 %v362
    %391 = vmatpush.xpose.msra.mxu0 %v360
    %392 = vmatmul.f32.gmra.mxu0 %v356
    %v393 = vpop.f32.mrf.mxu0
    %v394 = vadd.f32 %v38, %v393
    %395 = vmatmul.f32.gmra.mxu0 %v358
    %v396 = vpop.f32.mrf.mxu0
    %v397 = vadd.f32 %v39, %v396
    %398 = vdwg.mxu0
    %v399 = vsel %vm284, %v394, -inf
    %400 = vmax.xlane.f32.xlu0 %v399
    %v401 = vpop.xlane.xlu0 %400
    %v402 = vsel %vm284, %v397, -inf
    %403 = vmax.xlane.f32.xlu0 %v402
    %v404 = vpop.xlane.xlu0 %403
    %v405 = vsub.f32 %v394, %v401
    %v406 = vsub.f32 %v397, %v404
    %v407 = vmul.f32 %v405, 1.442695
    %v408 = vpow.pop %v407
    %v409 = vmul.f32 %v406, 1.442695
    %v410 = vpow.pop %v409
    %v411 = vsel %vm284, %v408, 0.0
    %412 = vadd.xlane.f32.xlu0 %v411
    %v413 = vpop.xlane.xlu0 %412
    %v414 = vsel %vm284, %v410, 0.0
    %415 = vadd.xlane.f32.xlu0 %v414
    %v416 = vpop.xlane.xlu0 %415
    %v417 = vrcp.pop %v413
    %v418 = vrcp.pop %v416
    %v419 = vmul.f32 %v408, %v417
    %v420 = vmul.f32 %v410, %v418
    %429 = vrot.lane.b32.xlu0 %v207, 120
    %v430 = vpop.permute.xlu0 %429
    %431 = vrot.lane.b32.xlu0 %v210, 120
    %v432 = vpop.permute.xlu0 %431
    %433 = vrot.lane.b32.xlu0 %v213, 120
    %v434 = vpop.permute.xlu0 %433
    %435 = vrot.lane.b32.xlu0 %v216, 120
    %v436 = vpop.permute.xlu0 %435
    %437 = vrot.lane.b32.xlu0 %v219, 120
    %v438 = vpop.permute.xlu0 %437
    %439 = vrot.lane.b32.xlu0 %v222, 120
    %v440 = vpop.permute.xlu0 %439
    %441 = vrot.lane.b32.xlu0 %v225, 120
    %v442 = vpop.permute.xlu0 %441
    %443 = vrot.lane.b32.xlu0 %v228, 120
    %v444 = vpop.permute.xlu0 %443
    %v454 = vsel %vm284, %v419, 0
    %v457 = vsel %vm284, %v420, 0
    %459 = vmatpush.msra.mxu0 0.0
    %460 = vmatpush.msra.mxu0 0.0
    %461 = vmatpush.msra.mxu0 0.0
    %462 = vmatpush.msra.mxu0 0.0
    %463 = vmatpush.msra.mxu0 0.0
    %464 = vmatpush.msra.mxu0 0.0
    %465 = vmatpush.msra.mxu0 0.0
    %466 = vmatpush.msra.mxu0 0.0
    %467 = vmatpush.msra.mxu0 %v444
    %468 = vmatpush.msra.mxu0 %v442
    %469 = vmatpush.msra.mxu0 %v440
    %470 = vmatpush.msra.mxu0 %v438
    %471 = vmatpush.msra.mxu0 %v436
    %472 = vmatpush.msra.mxu0 %v434
    %473 = vmatpush.msra.mxu0 %v432
    %474 = vmatpush.msra.mxu0 %v430
    %475 = vmatmul.f32.gmra.mxu0 %v454
    %v476 = vpop.f32.mrf.mxu0
    %v477 = vadd.f32 0.0, %v476
    %478 = vmatmul.f32.gmra.mxu0 %v457
    %v479 = vpop.f32.mrf.mxu0
    %v480 = vadd.f32 0.0, %v479
    %481 = vdwg.mxu0
    %482 = vrot.lane.b32.xlu0 %v83, 112
    %v483 = vpop.permute.xlu0 %482
    %484 = vrot.lane.b32.xlu0 %v86, 112
    %v485 = vpop.permute.xlu0 %484
    %486 = vrot.lane.b32.xlu0 %v136, 112
    %v487 = vpop.permute.xlu0 %486
    %488 = vrot.lane.b32.xlu0 %v139, 112
    %v489 = vpop.permute.xlu0 %488
    %490 = vrot.lane.b32.xlu0 %v142, 112
    %v491 = vpop.permute.xlu0 %490
    %492 = vrot.lane.b32.xlu0 %v145, 112
    %v493 = vpop.permute.xlu0 %492
    %494 = vrot.lane.b32.xlu0 %v148, 112
    %v495 = vpop.permute.xlu0 %494
    %496 = vrot.lane.b32.xlu0 %v151, 112
    %v497 = vpop.permute.xlu0 %496
    %498 = vrot.lane.b32.xlu0 %v154, 112
    %v499 = vpop.permute.xlu0 %498
    %500 = vrot.lane.b32.xlu0 %v157, 112
    %v501 = vpop.permute.xlu0 %500
    %v502 = vsel %vm230, %v483, 0
    %v504 = vsel %vm230, %v485, 0
    %v506 = vsel %vm230, %v487, 0
    %v508 = vsel %vm230, %v489, 0
    %v510 = vsel %vm230, %v491, 0
    %v512 = vsel %vm230, %v493, 0
    %v514 = vsel %vm230, %v495, 0
    %v516 = vsel %vm230, %v497, 0
    %v518 = vsel %vm230, %v499, 0
    %v520 = vsel %vm230, %v501, 0
    %522 = vmatpush.xpose.msra.mxu0 0.0
    %523 = vmatpush.xpose.msra.mxu0 0.0
    %524 = vmatpush.xpose.msra.mxu0 0.0
    %525 = vmatpush.xpose.msra.mxu0 0.0
    %526 = vmatpush.xpose.msra.mxu0 0.0
    %527 = vmatpush.xpose.msra.mxu0 0.0
    %528 = vmatpush.xpose.msra.mxu0 0.0
    %529 = vmatpush.xpose.msra.mxu0 0.0
    %530 = vmatpush.xpose.msra.mxu0 %v520
    %531 = vmatpush.xpose.msra.mxu0 %v518
    %532 = vmatpush.xpose.msra.mxu0 %v516
    %533 = vmatpush.xpose.msra.mxu0 %v514
    %534 = vmatpush.xpose.msra.mxu0 %v512
    %535 = vmatpush.xpose.msra.mxu0 %v510
    %536 = vmatpush.xpose.msra.mxu0 %v508
    %537 = vmatpush.xpose.msra.mxu0 %v506
    %538 = vmatmul.f32.gmra.mxu0 %v502
    %v539 = vpop.f32.mrf.mxu0
    %v540 = vadd.f32 %v38, %v539
    %541 = vmatmul.f32.gmra.mxu0 %v504
    %v542 = vpop.f32.mrf.mxu0
    %v543 = vadd.f32 %v39, %v542
    %544 = vdwg.mxu0
    %v545 = vsel %vm284, %v540, -inf
    %546 = vmax.xlane.f32.xlu0 %v545
    %v547 = vpop.xlane.xlu0 %546
    %v548 = vsel %vm284, %v543, -inf
    %549 = vmax.xlane.f32.xlu0 %v548
    %v550 = vpop.xlane.xlu0 %549
    %v551 = vsub.f32 %v540, %v547
    %v552 = vsub.f32 %v543, %v550
    %v553 = vmul.f32 %v551, 1.442695
    %v554 = vpow.pop %v553
    %v555 = vmul.f32 %v552, 1.442695
    %v556 = vpow.pop %v555
    %v557 = vsel %vm284, %v554, 0.0
    %558 = vadd.xlane.f32.xlu0 %v557
    %v559 = vpop.xlane.xlu0 %558
    %v560 = vsel %vm284, %v556, 0.0
    %561 = vadd.xlane.f32.xlu0 %v560
    %v562 = vpop.xlane.xlu0 %561
    %v563 = vrcp.pop %v559
    %v564 = vrcp.pop %v562
    %v565 = vmul.f32 %v554, %v563
    %v566 = vmul.f32 %v556, %v564
    %567 = vrot.lane.b32.xlu0 %v207, 112
    %v568 = vpop.permute.xlu0 %567
    %569 = vrot.lane.b32.xlu0 %v210, 112
    %v570 = vpop.permute.xlu0 %569
    %571 = vrot.lane.b32.xlu0 %v213, 112
    %v572 = vpop.permute.xlu0 %571
    %573 = vrot.lane.b32.xlu0 %v216, 112
    %v574 = vpop.permute.xlu0 %573
    %575 = vrot.lane.b32.xlu0 %v219, 112
    %v576 = vpop.permute.xlu0 %575
    %577 = vrot.lane.b32.xlu0 %v222, 112
    %v578 = vpop.permute.xlu0 %577
    %579 = vrot.lane.b32.xlu0 %v225, 112
    %v580 = vpop.permute.xlu0 %579
    %581 = vrot.lane.b32.xlu0 %v228, 112
    %v582 = vpop.permute.xlu0 %581
    %v592 = vsel %vm284, %v565, 0
    %v595 = vsel %vm284, %v566, 0
    %597 = vmatpush.msra.mxu0 0.0
    %598 = vmatpush.msra.mxu0 0.0
    %599 = vmatpush.msra.mxu0 0.0
    %600 = vmatpush.msra.mxu0 0.0
    %601 = vmatpush.msra.mxu0 0.0
    %602 = vmatpush.msra.mxu0 0.0
    %603 = vmatpush.msra.mxu0 0.0
    %604 = vmatpush.msra.mxu0 0.0
    %605 = vmatpush.msra.mxu0 %v582
    %606 = vmatpush.msra.mxu0 %v580
    %607 = vmatpush.msra.mxu0 %v578
    %608 = vmatpush.msra.mxu0 %v576
    %609 = vmatpush.msra.mxu0 %v574
    %610 = vmatpush.msra.mxu0 %v572
    %611 = vmatpush.msra.mxu0 %v570
    %612 = vmatpush.msra.mxu0 %v568
    %613 = vmatmul.f32.gmra.mxu0 %v592
    %v614 = vpop.f32.mrf.mxu0
    %v615 = vadd.f32 0.0, %v614
    %616 = vmatmul.f32.gmra.mxu0 %v595
    %v617 = vpop.f32.mrf.mxu0
    %v618 = vadd.f32 0.0, %v617
    %619 = vdwg.mxu0
    %620 = vrot.lane.b32.xlu0 %v83, 104
    %v621 = vpop.permute.xlu0 %620
    %622 = vrot.lane.b32.xlu0 %v86, 104
    %v623 = vpop.permute.xlu0 %622
    %624 = vrot.lane.b32.xlu0 %v136, 104
    %v625 = vpop.permute.xlu0 %624
    %626 = vrot.lane.b32.xlu0 %v139, 104
    %v627 = vpop.permute.xlu0 %626
    %628 = vrot.lane.b32.xlu0 %v142, 104
    %v629 = vpop.permute.xlu0 %628
    %630 = vrot.lane.b32.xlu0 %v145, 104
    %v631 = vpop.permute.xlu0 %630
    %632 = vrot.lane.b32.xlu0 %v148, 104
    %v633 = vpop.permute.xlu0 %632
    %634 = vrot.lane.b32.xlu0 %v151, 104
    %v635 = vpop.permute.xlu0 %634
    %636 = vrot.lane.b32.xlu0 %v154, 104
    %v637 = vpop.permute.xlu0 %636
    %638 = vrot.lane.b32.xlu0 %v157, 104
    %v639 = vpop.permute.xlu0 %638
    %v640 = vsel %vm230, %v621, 0
    %v642 = vsel %vm230, %v623, 0
    %v644 = vsel %vm230, %v625, 0
    %v646 = vsel %vm230, %v627, 0
    %v648 = vsel %vm230, %v629, 0
    %v650 = vsel %vm230, %v631, 0
    %v652 = vsel %vm230, %v633, 0
    %v654 = vsel %vm230, %v635, 0
    %v656 = vsel %vm230, %v637, 0
    %v658 = vsel %vm230, %v639, 0
    %660 = vmatpush.xpose.msra.mxu0 0.0
    %661 = vmatpush.xpose.msra.mxu0 0.0
    %662 = vmatpush.xpose.msra.mxu0 0.0
    %663 = vmatpush.xpose.msra.mxu0 0.0
    %664 = vmatpush.xpose.msra.mxu0 0.0
    %665 = vmatpush.xpose.msra.mxu0 0.0
    %666 = vmatpush.xpose.msra.mxu0 0.0
    %667 = vmatpush.xpose.msra.mxu0 0.0
    %668 = vmatpush.xpose.msra.mxu0 %v658
    %669 = vmatpush.xpose.msra.mxu0 %v656
    %670 = vmatpush.xpose.msra.mxu0 %v654
    %671 = vmatpush.xpose.msra.mxu0 %v652
    %672 = vmatpush.xpose.msra.mxu0 %v650
    %673 = vmatpush.xpose.msra.mxu0 %v648
    %674 = vmatpush.xpose.msra.mxu0 %v646
    %675 = vmatpush.xpose.msra.mxu0 %v644
    %676 = vmatmul.f32.gmra.mxu0 %v640
    %v677 = vpop.f32.mrf.mxu0
    %v678 = vadd.f32 %v38, %v677
    %679 = vmatmul.f32.gmra.mxu0 %v642
    %v680 = vpop.f32.mrf.mxu0
    %v681 = vadd.f32 %v39, %v680
    %682 = vdwg.mxu0
    %v683 = vsel %vm284, %v678, -inf
    %684 = vmax.xlane.f32.xlu0 %v683
    %v685 = vpop.xlane.xlu0 %684
    %v686 = vsel %vm284, %v681, -inf
    %687 = vmax.xlane.f32.xlu0 %v686
    %v688 = vpop.xlane.xlu0 %687
    %v689 = vsub.f32 %v678, %v685
    %v690 = vsub.f32 %v681, %v688
    %v691 = vmul.f32 %v689, 1.442695
    %v692 = vpow.pop %v691
    %v693 = vmul.f32 %v690, 1.442695
    %v694 = vpow.pop %v693
    %v695 = vsel %vm284, %v692, 0.0
    %696 = vadd.xlane.f32.xlu0 %v695
    %v697 = vpop.xlane.xlu0 %696
    %v698 = vsel %vm284, %v694, 0.0
    %699 = vadd.xlane.f32.xlu0 %v698
    %v700 = vpop.xlane.xlu0 %699
    %v701 = vrcp.pop %v697
    %v702 = vrcp.pop %v700
    %v703 = vmul.f32 %v692, %v701
    %v704 = vmul.f32 %v694, %v702
    %705 = vrot.lane.b32.xlu0 %v207, 104
    %v706 = vpop.permute.xlu0 %705
    %707 = vrot.lane.b32.xlu0 %v210, 104
    %v708 = vpop.permute.xlu0 %707
    %709 = vrot.lane.b32.xlu0 %v213, 104
    %v710 = vpop.permute.xlu0 %709
    %711 = vrot.lane.b32.xlu0 %v216, 104
    %v712 = vpop.permute.xlu0 %711
    %713 = vrot.lane.b32.xlu0 %v219, 104
    %v714 = vpop.permute.xlu0 %713
    %715 = vrot.lane.b32.xlu0 %v222, 104
    %v716 = vpop.permute.xlu0 %715
    %717 = vrot.lane.b32.xlu0 %v225, 104
    %v718 = vpop.permute.xlu0 %717
    %719 = vrot.lane.b32.xlu0 %v228, 104
    %v720 = vpop.permute.xlu0 %719
    %v730 = vsel %vm284, %v703, 0
    %v733 = vsel %vm284, %v704, 0
    %735 = vmatpush.msra.mxu0 0.0
    %736 = vmatpush.msra.mxu0 0.0
    %737 = vmatpush.msra.mxu0 0.0
    %738 = vmatpush.msra.mxu0 0.0
    %739 = vmatpush.msra.mxu0 0.0
    %740 = vmatpush.msra.mxu0 0.0
    %741 = vmatpush.msra.mxu0 0.0
    %742 = vmatpush.msra.mxu0 0.0
    %743 = vmatpush.msra.mxu0 %v720
    %744 = vmatpush.msra.mxu0 %v718
    %745 = vmatpush.msra.mxu0 %v716
    %746 = vmatpush.msra.mxu0 %v714
    %747 = vmatpush.msra.mxu0 %v712
    %748 = vmatpush.msra.mxu0 %v710
    %749 = vmatpush.msra.mxu0 %v708
    %750 = vmatpush.msra.mxu0 %v706
    %751 = vmatmul.f32.gmra.mxu0 %v730
    %v752 = vpop.f32.mrf.mxu0
    %v753 = vadd.f32 0.0, %v752
    %754 = vmatmul.f32.gmra.mxu0 %v733
    %v755 = vpop.f32.mrf.mxu0
    %v756 = vadd.f32 0.0, %v755
    %757 = vdwg.mxu0
    %760 = vrot.lane.b32.xlu0 %v477, 8
    %v761 = vpop.permute.xlu0 %760
    %762 = vrot.lane.b32.xlu0 %v480, 8
    %v763 = vpop.permute.xlu0 %762
    %768 = vrot.lane.b32.xlu0 %v615, 16
    %v769 = vpop.permute.xlu0 %768
    %770 = vrot.lane.b32.xlu0 %v618, 16
    %v771 = vpop.permute.xlu0 %770
    %776 = vrot.lane.b32.xlu0 %v753, 24
    %v777 = vpop.permute.xlu0 %776
    %778 = vrot.lane.b32.xlu0 %v756, 24
    %v779 = vpop.permute.xlu0 %778
    %v782 = vsel %vm230, %v331, %v761
    %v783 = vsel %vm230, %v334, %v763
    %vm784 = vcmask 130048
    %v785 = vsel %vm784, %v782, %v769
    %v786 = vsel %vm784, %v783, %v771
    %vm787 = vcmask 195584
    %v788 = vsel %vm787, %v785, %v777
    %v789 = vsel %vm787, %v786, %v779
    %v790 = vld [vmem:[%s2 + $0x60] sm:$0xff]
    %v791 = vld [vmem:[%s2 + $0x68] sm:$0xff]
    %v792 = vld [vmem:[%s2 + $0x70] sm:$0xff]
    %v793 = vld [vmem:[%s2 + $0x78] sm:$0xff]
    %v794 = vld [vmem:[%s3 + $0x3] sm:$0x1]
    %v795 = vperm.slane %v794, 0
    %v797 = vsel %vm58, %v788, 0
    %v800 = vsel %vm58, %v789, 0
    %802 = vmatpush.msra.mxu0 0.0
    %803 = vmatpush.msra.mxu0 0.0
    %804 = vmatpush.msra.mxu0 0.0
    %805 = vmatpush.msra.mxu0 0.0
    %806 = vmatpush.msra.mxu0 0.0
    %807 = vmatpush.msra.mxu0 0.0
    %808 = vmatpush.msra.mxu0 0.0
    %809 = vmatpush.msra.mxu0 0.0
    %810 = vmatpush.msra.mxu0 0.0
    %811 = vmatpush.msra.mxu0 0.0
    %812 = vmatpush.msra.mxu0 0.0
    %813 = vmatpush.msra.mxu0 0.0
    %814 = vmatpush.msra.mxu0 %v793
    %815 = vmatpush.msra.mxu0 %v792
    %816 = vmatpush.msra.mxu0 %v791
    %817 = vmatpush.msra.mxu0 %v790
    %818 = vmatmul.f32.gmra.mxu0 %v797
    %v819 = vpop.f32.mrf.mxu0
    %v820 = vadd.f32 %v795, %v819
    %821 = vmatmul.f32.gmra.mxu0 %v800
    %v822 = vpop.f32.mrf.mxu0
    %v823 = vadd.f32 %v795, %v822
    %824 = vdwg.mxu0
    %v825 = vadd.f32 %v34, %v820
    %v826 = vadd.f32 %v35, %v823
    %v827 = vld [vmem:[%s3 + $0x4] sm:$0x1]
    %v828 = vld [vmem:[%s3 + $0x5] sm:$0x1]
    %v829 = vsel %vm58, %v825, 0.0
    %830 = vadd.xlane.f32.xlu0 %v829
    %v831 = vpop.xlane.xlu0 %830
    %v832 = vsel %vm58, %v826, 0.0
    %833 = vadd.xlane.f32.xlu0 %v832
    %v834 = vpop.xlane.xlu0 %833
    %v835 = vmul.f32 %v825, %v825
    %v836 = vmul.f32 %v826, %v826
    %v837 = vsel %vm58, %v835, 0.0
    %838 = vadd.xlane.f32.xlu0 %v837
    %v839 = vpop.xlane.xlu0 %838
    %v840 = vsel %vm58, %v836, 0.0
    %841 = vadd.xlane.f32.xlu0 %v840
    %v842 = vpop.xlane.xlu0 %841
    %v843 = vmul.f32 %v831, 0.03125
    %v844 = vmul.f32 %v834, 0.03125
    %v845 = vmul.f32 %v839, 0.03125
    %v846 = vmul.f32 %v842, 0.03125
    %v847 = vmul.f32 %v843, %v843
    %v848 = vmul.f32 %v844, %v844
    %v849 = vsub.f32 %v845, %v847
    %v850 = vsub.f32 %v846, %v848
    %v851 = vsub.f32 %v825, %v843
    %v852 = vsub.f32 %v826, %v844
    %v853 = vadd.f32 %v849, 1e-05
    %v854 = vadd.f32 %v850, 1e-05
    %v855 = vrsqrt.pop %v853
    %v856 = vmul.f32 %v855, %v853
    %v857 = vmul.f32 %v856, %v855
    %v858 = vmul.f32 0.5, %v857
    %v859 = vsub.f32 1.5, %v858
    %v860 = vmul.f32 %v855, %v859
    %vm861 = vweird.f32 %v853
    %vm862 = vweird.f32 %v855
    %vm863 = vmor %vm861, %vm862
    %v864 = vsel %vm863, %v855, %v860
    %v865 = vrsqrt.pop %v854
    %v866 = vmul.f32 %v865, %v854
    %v867 = vmul.f32 %v866, %v865
    %v868 = vmul.f32 0.5, %v867
    %v869 = vsub.f32 1.5, %v868
    %v870 = vmul.f32 %v865, %v869
    %vm871 = vweird.f32 %v854
    %vm872 = vweird.f32 %v865
    %vm873 = vmor %vm871, %vm872
    %v874 = vsel %vm873, %v865, %v870
    %v875 = vmul.f32 %v851, %v864
    %v876 = vmul.f32 %v852, %v874
    %v877 = vperm.slane %v827, 0
    %v878 = vmul.f32 %v875, %v877
    %v879 = vmul.f32 %v876, %v877
    %v880 = vperm.slane %v828, 0
    %v881 = vadd.f32 %v878, %v880
    %v882 = vadd.f32 %v879, %v880
    %v883 = vadd.f32 %v881, %v36
    %v884 = vadd.f32 %v882, %v37
    %v885 = vld [vmem:[%s2 + $0x80] sm:$0xff]
    %v886 = vld [vmem:[%s2 + $0x88] sm:$0xff]
    %v887 = vld [vmem:[%s2 + $0x90] sm:$0xff]
    %v888 = vld [vmem:[%s2 + $0x98] sm:$0xff]
    %v889 = vld [vmem:[%s3 + $0x6] sm:$0x1]
    %v890 = vperm.slane %v889, 0
    %v892 = vsel %vm58, %v883, 0
    %v895 = vsel %vm58, %v884, 0
    %897 = vmatpush.msra.mxu0 0.0
    %898 = vmatpush.msra.mxu0 0.0
    %899 = vmatpush.msra.mxu0 0.0
    %900 = vmatpush.msra.mxu0 0.0
    %901 = vmatpush.msra.mxu0 0.0
    %902 = vmatpush.msra.mxu0 0.0
    %903 = vmatpush.msra.mxu0 0.0
    %904 = vmatpush.msra.mxu0 0.0
    %905 = vmatpush.msra.mxu0 0.0
    %906 = vmatpush.msra.mxu0 0.0
    %907 = vmatpush.msra.mxu0 0.0
    %908 = vmatpush.msra.mxu0 0.0
    %909 = vmatpush.msra.mxu0 %v888
    %910 = vmatpush.msra.mxu0 %v887
    %911 = vmatpush.msra.mxu0 %v886
    %912 = vmatpush.msra.mxu0 %v885
    %913 = vmatmul.f32.gmra.mxu0 %v892
    %v914 = vpop.f32.mrf.mxu0
    %v915 = vadd.f32 %v890, %v914
    %916 = vmatmul.f32.gmra.mxu0 %v895
    %v917 = vpop.f32.mrf.mxu0
    %v918 = vadd.f32 %v890, %v917
    %919 = vdwg.mxu0
    %v920 = vld [vmem:[%s2 + $0xa0] sm:$0xff]
    %v921 = vld [vmem:[%s2 + $0xa8] sm:$0xff]
    %v922 = vld [vmem:[%s2 + $0xb0] sm:$0xff]
    %v923 = vld [vmem:[%s2 + $0xb8] sm:$0xff]
    %v924 = vld [vmem:[%s3 + $0x7] sm:$0x1]
    %v925 = vperm.slane %v924, 0
    %v927 = vsel %vm58, %v881, 0
    %v930 = vsel %vm58, %v882, 0
    %932 = vmatpush.msra.mxu0 0.0
    %933 = vmatpush.msra.mxu0 0.0
    %934 = vmatpush.msra.mxu0 0.0
    %935 = vmatpush.msra.mxu0 0.0
    %936 = vmatpush.msra.mxu0 0.0
    %937 = vmatpush.msra.mxu0 0.0
    %938 = vmatpush.msra.mxu0 0.0
    %939 = vmatpush.msra.mxu0 0.0
    %940 = vmatpush.msra.mxu0 0.0
    %941 = vmatpush.msra.mxu0 0.0
    %942 = vmatpush.msra.mxu0 0.0
    %943 = vmatpush.msra.mxu0 0.0
    %944 = vmatpush.msra.mxu0 %v923
    %945 = vmatpush.msra.mxu0 %v922
    %946 = vmatpush.msra.mxu0 %v921
    %947 = vmatpush.msra.mxu0 %v920
    %948 = vmatmul.f32.gmra.mxu0 %v927
    %v949 = vpop.f32.mrf.mxu0
    %v950 = vadd.f32 %v925, %v949
    %951 = vmatmul.f32.gmra.mxu0 %v930
    %v952 = vpop.f32.mrf.mxu0
    %v953 = vadd.f32 %v925, %v952
    %954 = vdwg.mxu0
    %957 = vrot.lane.b32.xlu0 %v915, 96
    %v958 = vpop.permute.xlu0 %957
    %959 = vrot.lane.b32.xlu0 %v918, 96
    %v960 = vpop.permute.xlu0 %959
    %v961 = vsel %vm230, %v915, 0
    %v963 = vsel %vm230, %v918, 0
    %v965 = vsel %vm230, %v958, 0
    %v967 = vsel %vm230, %v960, 0
    %969 = vmatpush.xpose.msra.mxu0 0.0
    %970 = vmatpush.xpose.msra.mxu0 0.0
    %971 = vmatpush.xpose.msra.mxu0 0.0
    %972 = vmatpush.xpose.msra.mxu0 0.0
    %973 = vmatpush.xpose.msra.mxu0 0.0
    %974 = vmatpush.xpose.msra.mxu0 0.0
    %975 = vmatpush.xpose.msra.mxu0 0.0
    %976 = vmatpush.xpose.msra.mxu0 0.0
    %977 = vmatpush.xpose.msra.mxu0 0.0
    %978 = vmatpush.xpose.msra.mxu0 0.0
    %979 = vmatpush.xpose.msra.mxu0 0.0
    %980 = vmatpush.xpose.msra.mxu0 0.0
    %981 = vmatpush.xpose.msra.mxu0 0.0
    %982 = vmatpush.xpose.msra.mxu0 0.0
    %983 = vmatpush.xpose.msra.mxu0 %v967
    %984 = vmatpush.xpose.msra.mxu0 %v965
    %985 = vmatmul.f32.gmra.mxu0 %v961
    %v986 = vpop.f32.mrf.mxu0
    %v987 = vadd.f32 %v40, %v986
    %988 = vmatmul.f32.gmra.mxu0 %v963
    %v989 = vpop.f32.mrf.mxu0
    %v990 = vadd.f32 %v41, %v989
    %991 = vdwg.mxu0
    %v992 = vsel %vm784, %v987, -inf
    %993 = vmax.xlane.f32.xlu0 %v992
    %v994 = vpop.xlane.xlu0 %993
    %v995 = vsel %vm784, %v990, -inf
    %996 = vmax.xlane.f32.xlu0 %v995
    %v997 = vpop.xlane.xlu0 %996
    %v998 = vsub.f32 %v987, %v994
    %v999 = vsub.f32 %v990, %v997
    %v1000 = vmul.f32 %v998, 1.442695
    %v1001 = vpow.pop %v1000
    %v1002 = vmul.f32 %v999, 1.442695
    %v1003 = vpow.pop %v1002
    %v1004 = vsel %vm784, %v1001, 0.0
    %1005 = vadd.xlane.f32.xlu0 %v1004
    %v1006 = vpop.xlane.xlu0 %1005
    %v1007 = vsel %vm784, %v1003, 0.0
    %1008 = vadd.xlane.f32.xlu0 %v1007
    %v1009 = vpop.xlane.xlu0 %1008
    %v1010 = vrcp.pop %v1006
    %v1011 = vrcp.pop %v1009
    %v1012 = vmul.f32 %v1001, %v1010
    %v1013 = vmul.f32 %v1003, %v1011
    %v1015 = vsel %vm784, %v1012, 0
    %v1018 = vsel %vm784, %v1013, 0
    %1020 = vmatpush.msra.mxu0 0.0
    %1021 = vmatpush.msra.mxu0 0.0
    %1022 = vmatpush.msra.mxu0 0.0
    %1023 = vmatpush.msra.mxu0 0.0
    %1024 = vmatpush.msra.mxu0 0.0
    %1025 = vmatpush.msra.mxu0 0.0
    %1026 = vmatpush.msra.mxu0 0.0
    %1027 = vmatpush.msra.mxu0 0.0
    %1028 = vmatpush.msra.mxu0 0.0
    %1029 = vmatpush.msra.mxu0 0.0
    %1030 = vmatpush.msra.mxu0 0.0
    %1031 = vmatpush.msra.mxu0 0.0
    %1032 = vmatpush.msra.mxu0 0.0
    %1033 = vmatpush.msra.mxu0 0.0
    %1034 = vmatpush.msra.mxu0 %v953
    %1035 = vmatpush.msra.mxu0 %v950
    %1036 = vmatmul.f32.gmra.mxu0 %v1015
    %v1037 = vpop.f32.mrf.mxu0
    %v1038 = vadd.f32 0.0, %v1037
    %1039 = vmatmul.f32.gmra.mxu0 %v1018
    %v1040 = vpop.f32.mrf.mxu0
    %v1041 = vadd.f32 0.0, %v1040
    %1042 = vdwg.mxu0
    %1043 = vrot.lane.b32.xlu0 %v915, 120
    %v1044 = vpop.permute.xlu0 %1043
    %1045 = vrot.lane.b32.xlu0 %v918, 120
    %v1046 = vpop.permute.xlu0 %1045
    %1047 = vrot.lane.b32.xlu0 %v915, 88
    %v1048 = vpop.permute.xlu0 %1047
    %1049 = vrot.lane.b32.xlu0 %v918, 88
    %v1050 = vpop.permute.xlu0 %1049
    %v1051 = vsel %vm230, %v1044, 0
    %v1053 = vsel %vm230, %v1046, 0
    %v1055 = vsel %vm230, %v1048, 0
    %v1057 = vsel %vm230, %v1050, 0
    %1059 = vmatpush.xpose.msra.mxu0 0.0
    %1060 = vmatpush.xpose.msra.mxu0 0.0
    %1061 = vmatpush.xpose.msra.mxu0 0.0
    %1062 = vmatpush.xpose.msra.mxu0 0.0
    %1063 = vmatpush.xpose.msra.mxu0 0.0
    %1064 = vmatpush.xpose.msra.mxu0 0.0
    %1065 = vmatpush.xpose.msra.mxu0 0.0
    %1066 = vmatpush.xpose.msra.mxu0 0.0
    %1067 = vmatpush.xpose.msra.mxu0 0.0
    %1068 = vmatpush.xpose.msra.mxu0 0.0
    %1069 = vmatpush.xpose.msra.mxu0 0.0
    %1070 = vmatpush.xpose.msra.mxu0 0.0
    %1071 = vmatpush.xpose.msra.mxu0 0.0
    %1072 = vmatpush.xpose.msra.mxu0 0.0
    %1073 = vmatpush.xpose.msra.mxu0 %v1057
    %1074 = vmatpush.xpose.msra.mxu0 %v1055
    %1075 = vmatmul.f32.gmra.mxu0 %v1051
    %v1076 = vpop.f32.mrf.mxu0
    %v1077 = vadd.f32 %v40, %v1076
    %1078 = vmatmul.f32.gmra.mxu0 %v1053
    %v1079 = vpop.f32.mrf.mxu0
    %v1080 = vadd.f32 %v41, %v1079
    %1081 = vdwg.mxu0
    %v1082 = vsel %vm784, %v1077, -inf
    %1083 = vmax.xlane.f32.xlu0 %v1082
    %v1084 = vpop.xlane.xlu0 %1083
    %v1085 = vsel %vm784, %v1080, -inf
    %1086 = vmax.xlane.f32.xlu0 %v1085
    %v1087 = vpop.xlane.xlu0 %1086
    %v1088 = vsub.f32 %v1077, %v1084
    %v1089 = vsub.f32 %v1080, %v1087
    %v1090 = vmul.f32 %v1088, 1.442695
    %v1091 = vpow.pop %v1090
    %v1092 = vmul.f32 %v1089, 1.442695
    %v1093 = vpow.pop %v1092
    %v1094 = vsel %vm784, %v1091, 0.0
    %1095 = vadd.xlane.f32.xlu0 %v1094
    %v1096 = vpop.xlane.xlu0 %1095
    %v1097 = vsel %vm784, %v1093, 0.0
    %1098 = vadd.xlane.f32.xlu0 %v1097
    %v1099 = vpop.xlane.xlu0 %1098
    %v1100 = vrcp.pop %v1096
    %v1101 = vrcp.pop %v1099
    %v1102 = vmul.f32 %v1091, %v1100
    %v1103 = vmul.f32 %v1093, %v1101
    %1106 = vrot.lane.b32.xlu0 %v950, 120
    %v1107 = vpop.permute.xlu0 %1106
    %1108 = vrot.lane.b32.xlu0 %v953, 120
    %v1109 = vpop.permute.xlu0 %1108
    %v1113 = vsel %vm784, %v1102, 0
    %v1116 = vsel %vm784, %v1103, 0
    %1118 = vmatpush.msra.mxu0 0.0
    %1119 = vmatpush.msra.mxu0 0.0
    %1120 = vmatpush.msra.mxu0 0.0
    %1121 = vmatpush.msra.mxu0 0.0
    %1122 = vmatpush.msra.mxu0 0.0
    %1123 = vmatpush.msra.mxu0 0.0
    %1124 = vmatpush.msra.mxu0 0.0
    %1125 = vmatpush.msra.mxu0 0.0
    %1126 = vmatpush.msra.mxu0 0.0
    %1127 = vmatpush.msra.mxu0 0.0
    %1128 = vmatpush.msra.mxu0 0.0
    %1129 = vmatpush.msra.mxu0 0.0
    %1130 = vmatpush.msra.mxu0 0.0
    %1131 = vmatpush.msra.mxu0 0.0
    %1132 = vmatpush.msra.mxu0 %v1109
    %1133 = vmatpush.msra.mxu0 %v1107
    %1134 = vmatmul.f32.gmra.mxu0 %v1113
    %v1135 = vpop.f32.mrf.mxu0
    %v1136 = vadd.f32 0.0, %v1135
    %1137 = vmatmul.f32.gmra.mxu0 %v1116
    %v1138 = vpop.f32.mrf.mxu0
    %v1139 = vadd.f32 0.0, %v1138
    %1140 = vdwg.mxu0
    %1141 = vrot.lane.b32.xlu0 %v915, 112
    %v1142 = vpop.permute.xlu0 %1141
    %1143 = vrot.lane.b32.xlu0 %v918, 112
    %v1144 = vpop.permute.xlu0 %1143
    %1145 = vrot.lane.b32.xlu0 %v915, 80
    %v1146 = vpop.permute.xlu0 %1145
    %1147 = vrot.lane.b32.xlu0 %v918, 80
    %v1148 = vpop.permute.xlu0 %1147
    %v1149 = vsel %vm230, %v1142, 0
    %v1151 = vsel %vm230, %v1144, 0
    %v1153 = vsel %vm230, %v1146, 0
    %v1155 = vsel %vm230, %v1148, 0
    %1157 = vmatpush.xpose.msra.mxu0 0.0
    %1158 = vmatpush.xpose.msra.mxu0 0.0
    %1159 = vmatpush.xpose.msra.mxu0 0.0
    %1160 = vmatpush.xpose.msra.mxu0 0.0
    %1161 = vmatpush.xpose.msra.mxu0 0.0
    %1162 = vmatpush.xpose.msra.mxu0 0.0
    %1163 = vmatpush.xpose.msra.mxu0 0.0
    %1164 = vmatpush.xpose.msra.mxu0 0.0
    %1165 = vmatpush.xpose.msra.mxu0 0.0
    %1166 = vmatpush.xpose.msra.mxu0 0.0
    %1167 = vmatpush.xpose.msra.mxu0 0.0
    %1168 = vmatpush.xpose.msra.mxu0 0.0
    %1169 = vmatpush.xpose.msra.mxu0 0.0
    %1170 = vmatpush.xpose.msra.mxu0 0.0
    %1171 = vmatpush.xpose.msra.mxu0 %v1155
    %1172 = vmatpush.xpose.msra.mxu0 %v1153
    %1173 = vmatmul.f32.gmra.mxu0 %v1149
    %v1174 = vpop.f32.mrf.mxu0
    %v1175 = vadd.f32 %v40, %v1174
    %1176 = vmatmul.f32.gmra.mxu0 %v1151
    %v1177 = vpop.f32.mrf.mxu0
    %v1178 = vadd.f32 %v41, %v1177
    %1179 = vdwg.mxu0
    %v1180 = vsel %vm784, %v1175, -inf
    %1181 = vmax.xlane.f32.xlu0 %v1180
    %v1182 = vpop.xlane.xlu0 %1181
    %v1183 = vsel %vm784, %v1178, -inf
    %1184 = vmax.xlane.f32.xlu0 %v1183
    %v1185 = vpop.xlane.xlu0 %1184
    %v1186 = vsub.f32 %v1175, %v1182
    %v1187 = vsub.f32 %v1178, %v1185
    %v1188 = vmul.f32 %v1186, 1.442695
    %v1189 = vpow.pop %v1188
    %v1190 = vmul.f32 %v1187, 1.442695
    %v1191 = vpow.pop %v1190
    %v1192 = vsel %vm784, %v1189, 0.0
    %1193 = vadd.xlane.f32.xlu0 %v1192
    %v1194 = vpop.xlane.xlu0 %1193
    %v1195 = vsel %vm784, %v1191, 0.0
    %1196 = vadd.xlane.f32.xlu0 %v1195
    %v1197 = vpop.xlane.xlu0 %1196
    %v1198 = vrcp.pop %v1194
    %v1199 = vrcp.pop %v1197
    %v1200 = vmul.f32 %v1189, %v1198
    %v1201 = vmul.f32 %v1191, %v1199
    %1202 = vrot.lane.b32.xlu0 %v950, 112
    %v1203 = vpop.permute.xlu0 %1202
    %1204 = vrot.lane.b32.xlu0 %v953, 112
    %v1205 = vpop.permute.xlu0 %1204
    %v1209 = vsel %vm784, %v1200, 0
    %v1212 = vsel %vm784, %v1201, 0
    %1214 = vmatpush.msra.mxu0 0.0
    %1215 = vmatpush.msra.mxu0 0.0
    %1216 = vmatpush.msra.mxu0 0.0
    %1217 = vmatpush.msra.mxu0 0.0
    %1218 = vmatpush.msra.mxu0 0.0
    %1219 = vmatpush.msra.mxu0 0.0
    %1220 = vmatpush.msra.mxu0 0.0
    %1221 = vmatpush.msra.mxu0 0.0
    %1222 = vmatpush.msra.mxu0 0.0
    %1223 = vmatpush.msra.mxu0 0.0
    %1224 = vmatpush.msra.mxu0 0.0
    %1225 = vmatpush.msra.mxu0 0.0
    %1226 = vmatpush.msra.mxu0 0.0
    %1227 = vmatpush.msra.mxu0 0.0
    %1228 = vmatpush.msra.mxu0 %v1205
    %1229 = vmatpush.msra.mxu0 %v1203
    %1230 = vmatmul.f32.gmra.mxu0 %v1209
    %v1231 = vpop.f32.mrf.mxu0
    %v1232 = vadd.f32 0.0, %v1231
    %1233 = vmatmul.f32.gmra.mxu0 %v1212
    %v1234 = vpop.f32.mrf.mxu0
    %v1235 = vadd.f32 0.0, %v1234
    %1236 = vdwg.mxu0
    %1237 = vrot.lane.b32.xlu0 %v915, 104
    %v1238 = vpop.permute.xlu0 %1237
    %1239 = vrot.lane.b32.xlu0 %v918, 104
    %v1240 = vpop.permute.xlu0 %1239
    %1241 = vrot.lane.b32.xlu0 %v915, 72
    %v1242 = vpop.permute.xlu0 %1241
    %1243 = vrot.lane.b32.xlu0 %v918, 72
    %v1244 = vpop.permute.xlu0 %1243
    %v1245 = vsel %vm230, %v1238, 0
    %v1247 = vsel %vm230, %v1240, 0
    %v1249 = vsel %vm230, %v1242, 0
    %v1251 = vsel %vm230, %v1244, 0
    %1253 = vmatpush.xpose.msra.mxu0 0.0
    %1254 = vmatpush.xpose.msra.mxu0 0.0
    %1255 = vmatpush.xpose.msra.mxu0 0.0
    %1256 = vmatpush.xpose.msra.mxu0 0.0
    %1257 = vmatpush.xpose.msra.mxu0 0.0
    %1258 = vmatpush.xpose.msra.mxu0 0.0
    %1259 = vmatpush.xpose.msra.mxu0 0.0
    %1260 = vmatpush.xpose.msra.mxu0 0.0
    %1261 = vmatpush.xpose.msra.mxu0 0.0
    %1262 = vmatpush.xpose.msra.mxu0 0.0
    %1263 = vmatpush.xpose.msra.mxu0 0.0
    %1264 = vmatpush.xpose.msra.mxu0 0.0
    %1265 = vmatpush.xpose.msra.mxu0 0.0
    %1266 = vmatpush.xpose.msra.mxu0 0.0
    %1267 = vmatpush.xpose.msra.mxu0 %v1251
    %1268 = vmatpush.xpose.msra.mxu0 %v1249
    %1269 = vmatmul.f32.gmra.mxu0 %v1245
    %v1270 = vpop.f32.mrf.mxu0
    %v1271 = vadd.f32 %v40, %v1270
    %1272 = vmatmul.f32.gmra.mxu0 %v1247
    %v1273 = vpop.f32.mrf.mxu0
    %v1274 = vadd.f32 %v41, %v1273
    %1275 = vdwg.mxu0
    %v1276 = vsel %vm784, %v1271, -inf
    %1277 = vmax.xlane.f32.xlu0 %v1276
    %v1278 = vpop.xlane.xlu0 %1277
    %v1279 = vsel %vm784, %v1274, -inf
    %1280 = vmax.xlane.f32.xlu0 %v1279
    %v1281 = vpop.xlane.xlu0 %1280
    %v1282 = vsub.f32 %v1271, %v1278
    %v1283 = vsub.f32 %v1274, %v1281
    %v1284 = vmul.f32 %v1282, 1.442695
    %v1285 = vpow.pop %v1284
    %v1286 = vmul.f32 %v1283, 1.442695
    %v1287 = vpow.pop %v1286
    %v1288 = vsel %vm784, %v1285, 0.0
    %1289 = vadd.xlane.f32.xlu0 %v1288
    %v1290 = vpop.xlane.xlu0 %1289
    %v1291 = vsel %vm784, %v1287, 0.0
    %1292 = vadd.xlane.f32.xlu0 %v1291
    %v1293 = vpop.xlane.xlu0 %1292
    %v1294 = vrcp.pop %v1290
    %v1295 = vrcp.pop %v1293
    %v1296 = vmul.f32 %v1285, %v1294
    %v1297 = vmul.f32 %v1287, %v1295
    %1298 = vrot.lane.b32.xlu0 %v950, 104
    %v1299 = vpop.permute.xlu0 %1298
    %1300 = vrot.lane.b32.xlu0 %v953, 104
    %v1301 = vpop.permute.xlu0 %1300
    %v1305 = vsel %vm784, %v1296, 0
    %v1308 = vsel %vm784, %v1297, 0
    %1310 = vmatpush.msra.mxu0 0.0
    %1311 = vmatpush.msra.mxu0 0.0
    %1312 = vmatpush.msra.mxu0 0.0
    %1313 = vmatpush.msra.mxu0 0.0
    %1314 = vmatpush.msra.mxu0 0.0
    %1315 = vmatpush.msra.mxu0 0.0
    %1316 = vmatpush.msra.mxu0 0.0
    %1317 = vmatpush.msra.mxu0 0.0
    %1318 = vmatpush.msra.mxu0 0.0
    %1319 = vmatpush.msra.mxu0 0.0
    %1320 = vmatpush.msra.mxu0 0.0
    %1321 = vmatpush.msra.mxu0 0.0
    %1322 = vmatpush.msra.mxu0 0.0
    %1323 = vmatpush.msra.mxu0 0.0
    %1324 = vmatpush.msra.mxu0 %v1301
    %1325 = vmatpush.msra.mxu0 %v1299
    %1326 = vmatmul.f32.gmra.mxu0 %v1305
    %v1327 = vpop.f32.mrf.mxu0
    %v1328 = vadd.f32 0.0, %v1327
    %1329 = vmatmul.f32.gmra.mxu0 %v1308
    %v1330 = vpop.f32.mrf.mxu0
    %v1331 = vadd.f32 0.0, %v1330
    %1332 = vdwg.mxu0
    %1335 = vrot.lane.b32.xlu0 %v1136, 8
    %v1336 = vpop.permute.xlu0 %1335
    %1337 = vrot.lane.b32.xlu0 %v1139, 8
    %v1338 = vpop.permute.xlu0 %1337
    %1343 = vrot.lane.b32.xlu0 %v1232, 16
    %v1344 = vpop.permute.xlu0 %1343
    %1345 = vrot.lane.b32.xlu0 %v1235, 16
    %v1346 = vpop.permute.xlu0 %1345
    %1351 = vrot.lane.b32.xlu0 %v1328, 24
    %v1352 = vpop.permute.xlu0 %1351
    %1353 = vrot.lane.b32.xlu0 %v1331, 24
    %v1354 = vpop.permute.xlu0 %1353
    %v1357 = vsel %vm230, %v1038, %v1336
    %v1358 = vsel %vm230, %v1041, %v1338
    %v1359 = vsel %vm784, %v1357, %v1344
    %v1360 = vsel %vm784, %v1358, %v1346
    %v1361 = vsel %vm787, %v1359, %v1352
    %v1362 = vsel %vm787, %v1360, %v1354
    %v1363 = vld [vmem:[%s2 + $0xc0] sm:$0xff]
    %v1364 = vld [vmem:[%s2 + $0xc8] sm:$0xff]
    %v1365 = vld [vmem:[%s2 + $0xd0] sm:$0xff]
    %v1366 = vld [vmem:[%s2 + $0xd8] sm:$0xff]
    %v1367 = vld [vmem:[%s3 + $0x8] sm:$0x1]
    %v1368 = vperm.slane %v1367, 0
    %v1370 = vsel %vm58, %v1361, 0
    %v1373 = vsel %vm58, %v1362, 0
    %1375 = vmatpush.msra.mxu0 0.0
    %1376 = vmatpush.msra.mxu0 0.0
    %1377 = vmatpush.msra.mxu0 0.0
    %1378 = vmatpush.msra.mxu0 0.0
    %1379 = vmatpush.msra.mxu0 0.0
    %1380 = vmatpush.msra.mxu0 0.0
    %1381 = vmatpush.msra.mxu0 0.0
    %1382 = vmatpush.msra.mxu0 0.0
    %1383 = vmatpush.msra.mxu0 0.0
    %1384 = vmatpush.msra.mxu0 0.0
    %1385 = vmatpush.msra.mxu0 0.0
    %1386 = vmatpush.msra.mxu0 0.0
    %1387 = vmatpush.msra.mxu0 %v1366
    %1388 = vmatpush.msra.mxu0 %v1365
    %1389 = vmatpush.msra.mxu0 %v1364
    %1390 = vmatpush.msra.mxu0 %v1363
    %1391 = vmatmul.f32.gmra.mxu0 %v1370
    %v1392 = vpop.f32.mrf.mxu0
    %v1393 = vadd.f32 %v1368, %v1392
    %1394 = vmatmul.f32.gmra.mxu0 %v1373
    %v1395 = vpop.f32.mrf.mxu0
    %v1396 = vadd.f32 %v1368, %v1395
    %1397 = vdwg.mxu0
    %v1398 = vadd.f32 %v881, %v1393
    %v1399 = vadd.f32 %v882, %v1396
    %v1400 = vld [vmem:[%s3 + $0x9] sm:$0x1]
    %v1401 = vld [vmem:[%s3 + $0xa] sm:$0x1]
    %v1402 = vsel %vm58, %v1398, 0.0
    %1403 = vadd.xlane.f32.xlu0 %v1402
    %v1404 = vpop.xlane.xlu0 %1403
    %v1405 = vsel %vm58, %v1399, 0.0
    %1406 = vadd.xlane.f32.xlu0 %v1405
    %v1407 = vpop.xlane.xlu0 %1406
    %v1408 = vmul.f32 %v1398, %v1398
    %v1409 = vmul.f32 %v1399, %v1399
    %v1410 = vsel %vm58, %v1408, 0.0
    %1411 = vadd.xlane.f32.xlu0 %v1410
    %v1412 = vpop.xlane.xlu0 %1411
    %v1413 = vsel %vm58, %v1409, 0.0
    %1414 = vadd.xlane.f32.xlu0 %v1413
    %v1415 = vpop.xlane.xlu0 %1414
    %v1416 = vmul.f32 %v1404, 0.03125
    %v1417 = vmul.f32 %v1407, 0.03125
    %v1418 = vmul.f32 %v1412, 0.03125
    %v1419 = vmul.f32 %v1415, 0.03125
    %v1420 = vmul.f32 %v1416, %v1416
    %v1421 = vmul.f32 %v1417, %v1417
    %v1422 = vsub.f32 %v1418, %v1420
    %v1423 = vsub.f32 %v1419, %v1421
    %v1424 = vsub.f32 %v1398, %v1416
    %v1425 = vsub.f32 %v1399, %v1417
    %v1426 = vadd.f32 %v1422, 1e-05
    %v1427 = vadd.f32 %v1423, 1e-05
    %v1428 = vrsqrt.pop %v1426
    %v1429 = vmul.f32 %v1428, %v1426
    %v1430 = vmul.f32 %v1429, %v1428
    %v1431 = vmul.f32 0.5, %v1430
    %v1432 = vsub.f32 1.5, %v1431
    %v1433 = vmul.f32 %v1428, %v1432
    %vm1434 = vweird.f32 %v1426
    %vm1435 = vweird.f32 %v1428
    %vm1436 = vmor %vm1434, %vm1435
    %v1437 = vsel %vm1436, %v1428, %v1433
    %v1438 = vrsqrt.pop %v1427
    %v1439 = vmul.f32 %v1438, %v1427
    %v1440 = vmul.f32 %v1439, %v1438
    %v1441 = vmul.f32 0.5, %v1440
    %v1442 = vsub.f32 1.5, %v1441
    %v1443 = vmul.f32 %v1438, %v1442
    %vm1444 = vweird.f32 %v1427
    %vm1445 = vweird.f32 %v1438
    %vm1446 = vmor %vm1444, %vm1445
    %v1447 = vsel %vm1446, %v1438, %v1443
    %v1448 = vmul.f32 %v1424, %v1437
    %v1449 = vmul.f32 %v1425, %v1447
    %v1450 = vperm.slane %v1400, 0
    %v1451 = vmul.f32 %v1448, %v1450
    %v1452 = vmul.f32 %v1449, %v1450
    %v1453 = vperm.slane %v1401, 0
    %v1454 = vadd.f32 %v1451, %v1453
    %v1455 = vadd.f32 %v1452, %v1453
    %v1456 = vld [vmem:[%s2 + $0xe0] sm:$0xff]
    %v1457 = vld [vmem:[%s2 + $0xe8] sm:$0xff]
    %v1458 = vld [vmem:[%s2 + $0xf0] sm:$0xff]
    %v1459 = vld [vmem:[%s2 + $0xf8] sm:$0xff]
    %v1460 = vld [vmem:[%s3 + $0xb] sm:$0x1]
    %v1461 = vperm.slane %v1460, 0
    %v1463 = vsel %vm58, %v1454, 0
    %v1466 = vsel %vm58, %v1455, 0
    %1468 = vmatpush.msra.mxu0 0.0
    %1469 = vmatpush.msra.mxu0 0.0
    %1470 = vmatpush.msra.mxu0 0.0
    %1471 = vmatpush.msra.mxu0 0.0
    %1472 = vmatpush.msra.mxu0 0.0
    %1473 = vmatpush.msra.mxu0 0.0
    %1474 = vmatpush.msra.mxu0 0.0
    %1475 = vmatpush.msra.mxu0 0.0
    %1476 = vmatpush.msra.mxu0 0.0
    %1477 = vmatpush.msra.mxu0 0.0
    %1478 = vmatpush.msra.mxu0 0.0
    %1479 = vmatpush.msra.mxu0 0.0
    %1480 = vmatpush.msra.mxu0 %v1459
    %1481 = vmatpush.msra.mxu0 %v1458
    %1482 = vmatpush.msra.mxu0 %v1457
    %1483 = vmatpush.msra.mxu0 %v1456
    %1484 = vmatmul.f32.gmra.mxu0 %v1463
    %v1485 = vpop.f32.mrf.mxu0
    %v1486 = vadd.f32 %v1461, %v1485
    %1487 = vmatmul.f32.gmra.mxu0 %v1466
    %v1488 = vpop.f32.mrf.mxu0
    %v1489 = vadd.f32 %v1461, %v1488
    %1490 = vdwg.mxu0
    %v1491 = vmax.f32 %v1486, 0.0
    %v1492 = vmax.f32 %v1489, 0.0
    %v1493 = vld [vmem:[%s2 + $0x100] sm:$0xff]
    %v1494 = vld [vmem:[%s2 + $0x108] sm:$0xff]
    %v1495 = vld [vmem:[%s2 + $0x110] sm:$0xff]
    %v1496 = vld [vmem:[%s2 + $0x118] sm:$0xff]
    %v1497 = vld [vmem:[%s2 + $0x120] sm:$0xff]
    %v1498 = vld [vmem:[%s2 + $0x128] sm:$0xff]
    %v1499 = vld [vmem:[%s2 + $0x130] sm:$0xff]
    %v1500 = vld [vmem:[%s2 + $0x138] sm:$0xff]
    %v1501 = vld [vmem:[%s3 + $0xc] sm:$0x1]
    %v1502 = vperm.slane %v1501, 0
    %v1504 = vsel %vm284, %v1491, 0
    %v1507 = vsel %vm284, %v1492, 0
    %1509 = vmatpush.msra.mxu0 0.0
    %1510 = vmatpush.msra.mxu0 0.0
    %1511 = vmatpush.msra.mxu0 0.0
    %1512 = vmatpush.msra.mxu0 0.0
    %1513 = vmatpush.msra.mxu0 0.0
    %1514 = vmatpush.msra.mxu0 0.0
    %1515 = vmatpush.msra.mxu0 0.0
    %1516 = vmatpush.msra.mxu0 0.0
    %1517 = vmatpush.msra.mxu0 %v1500
    %1518 = vmatpush.msra.mxu0 %v1499
    %1519 = vmatpush.msra.mxu0 %v1498
    %1520 = vmatpush.msra.mxu0 %v1497
    %1521 = vmatpush.msra.mxu0 %v1496
    %1522 = vmatpush.msra.mxu0 %v1495
    %1523 = vmatpush.msra.mxu0 %v1494
    %1524 = vmatpush.msra.mxu0 %v1493
    %1525 = vmatmul.f32.gmra.mxu0 %v1504
    %v1526 = vpop.f32.mrf.mxu0
    %v1527 = vadd.f32 %v1502, %v1526
    %1528 = vmatmul.f32.gmra.mxu0 %v1507
    %v1529 = vpop.f32.mrf.mxu0
    %v1530 = vadd.f32 %v1502, %v1529
    %1531 = vdwg.mxu0
    %v1532 = vadd.f32 %v1454, %v1527
    %v1533 = vadd.f32 %v1455, %v1530
    %v1534 = vld [vmem:[%s3 + $0xd] sm:$0x1]
    %v1535 = vld [vmem:[%s3 + $0xe] sm:$0x1]
    %v1536 = vsel %vm58, %v1532, 0.0
    %1537 = vadd.xlane.f32.xlu0 %v1536
    %v1538 = vpop.xlane.xlu0 %1537
    %v1539 = vsel %vm58, %v1533, 0.0
    %1540 = vadd.xlane.f32.xlu0 %v1539
    %v1541 = vpop.xlane.xlu0 %1540
    %v1542 = vmul.f32 %v1532, %v1532
    %v1543 = vmul.f32 %v1533, %v1533
    %v1544 = vsel %vm58, %v1542, 0.0
    %1545 = vadd.xlane.f32.xlu0 %v1544
    %v1546 = vpop.xlane.xlu0 %1545
    %v1547 = vsel %vm58, %v1543, 0.0
    %1548 = vadd.xlane.f32.xlu0 %v1547
    %v1549 = vpop.xlane.xlu0 %1548
    %v1550 = vmul.f32 %v1538, 0.03125
    %v1551 = vmul.f32 %v1541, 0.03125
    %v1552 = vmul.f32 %v1546, 0.03125
    %v1553 = vmul.f32 %v1549, 0.03125
    %v1554 = vmul.f32 %v1550, %v1550
    %v1555 = vmul.f32 %v1551, %v1551
    %v1556 = vsub.f32 %v1552, %v1554
    %v1557 = vsub.f32 %v1553, %v1555
    %v1558 = vsub.f32 %v1532, %v1550
    %v1559 = vsub.f32 %v1533, %v1551
    %v1560 = vadd.f32 %v1556, 1e-05
    %v1561 = vadd.f32 %v1557, 1e-05
    %v1562 = vrsqrt.pop %v1560
    %v1563 = vmul.f32 %v1562, %v1560
    %v1564 = vmul.f32 %v1563, %v1562
    %v1565 = vmul.f32 0.5, %v1564
    %v1566 = vsub.f32 1.5, %v1565
    %v1567 = vmul.f32 %v1562, %v1566
    %vm1568 = vweird.f32 %v1560
    %vm1569 = vweird.f32 %v1562
    %vm1570 = vmor %vm1568, %vm1569
    %v1571 = vsel %vm1570, %v1562, %v1567
    %v1572 = vrsqrt.pop %v1561
    %v1573 = vmul.f32 %v1572, %v1561
    %v1574 = vmul.f32 %v1573, %v1572
    %v1575 = vmul.f32 0.5, %v1574
    %v1576 = vsub.f32 1.5, %v1575
    %v1577 = vmul.f32 %v1572, %v1576
    %vm1578 = vweird.f32 %v1561
    %vm1579 = vweird.f32 %v1572
    %vm1580 = vmor %vm1578, %vm1579
    %v1581 = vsel %vm1580, %v1572, %v1577
    %v1582 = vmul.f32 %v1558, %v1571
    %v1583 = vmul.f32 %v1559, %v1581
    %v1584 = vperm.slane %v1534, 0
    %v1585 = vmul.f32 %v1582, %v1584
    %v1586 = vmul.f32 %v1583, %v1584
    %v1587 = vperm.slane %v1535, 0
    %v1588 = vadd.f32 %v1585, %v1587
    %v1589 = vadd.f32 %v1586, %v1587
    %1590 = vst.msk [vmem:[#allocation2] sm:$0xff] %vm58, %v1588
    %1591 = vst.msk [vmem:[#allocation2 + $0x8] sm:$0xff] %vm58, %v1589
    // Predicated region
    $region18: #{mask3d_decoder_block.1} parent=1 // pred_check
      _
    $region19: #{mask3d_decoder_block.1} parent=1 // pred_check_branch
      %1593 = sbr.rel (0) target = $region21
    $region20: #{mask3d_decoder_block.1} parent=1 // pred_region
      %1595 = vsyncadd [#allocation3], 0
      %s1596 = sshll.u32 [#allocation2], 4
      %s1597 = int_to_ptr.vmem [resolvable:$true] %s1596
      %s1598 = sshll.u32 %s4, 4
      %s1599 = int_to_ptr.hbm [resolvable:$true] %s1598
      %1604 = dma.vmem_to_hbm [thread:$0]  %s1597, 256, %s1599, [#allocation3], 128, 128, 8
    $region21: #{mask3d_decoder_block.1} parent=1 // pred_fallthru
      _
    // Predicated region
    $region22: #{mask3d_decoder_block.1} parent=1 // pred_check
      _
    $region23: #{mask3d_decoder_block.1} parent=1 // pred_check_branch
      %1606 = sbr.rel (0) target = $region25
    $region24: #{mask3d_decoder_block.1} parent=1 // pred_region
      %1608 = dma.done [#allocation3], 256
    $region25: #{mask3d_decoder_block.1} parent=1 // pred_fallthru
      _
    %1609 = vsyncpa [#allocation3], 1

</llo_original>
